<compile_context>
chip_gen: v5e
topology: v5e:2x2
jax: 0.10.0
libtpu: 0.0.40
codegen_flags: <defaults>
</compile_context>

<pallas_src>
import jax
import jax.numpy as jnp
from jax.experimental import pallas as pl
from jax.experimental.pallas import tpu as pltpu

EPS = 1e-5          # nn.BatchNorm2d default eps
TILE_MAX = 8192     # pixels per grid step on the lane axis (multiple of 128)


def _round_up(x, m):
    return (x + m - 1) // m * m


def _r2e_kernel(a_ref, x_ref, w0_ref, b0_ref, w1_ref, b1_ref,
                w2_ref, wr_ref, bc_ref, w3_ref, b3_ref, o_ref):
    """Fused forward for one (channels, pixel-tile) block.

    a_ref (SMEM f32[4]): PReLU alphas [a1, a2, a3, 0].
    All BGNorm scale/shift pairs are pre-folded into the conv weights/biases.
    """
    hp = jax.lax.Precision.HIGHEST
    x = x_ref[...]                                                  # (c_in, T)

    # Conv2d(_in, 16, 1)  ∘  BGNorm(16, 1)   (bn1 folded into w0/b0)
    g = jnp.dot(w0_ref[...], x, precision=hp,
                preferred_element_type=jnp.float32) + b0_ref[...]   # (16, T)

    # ---- ResBlock(16, 32, kernel_size=1, padding=0) --------------------------
    # main: PReLU -> Conv1x1(16->32)∘BN2 -> PReLU -> Conv1x1(32->32)·s3
    m = jnp.where(g >= 0.0, g, a_ref[0] * g)
    m = jnp.dot(w1_ref[...], m, precision=hp,
                preferred_element_type=jnp.float32) + b1_ref[...]   # (32, T)
    m = jnp.where(m >= 0.0, m, a_ref[1] * m)
    # main conv2 + grouped residual conv (block-diagonal dense) with BNr, BN3
    # and the bn1 compensation all folded; single combined bias after the sum.
    h = (jnp.dot(w2_ref[...], m, precision=hp,
                 preferred_element_type=jnp.float32)
         + jnp.dot(wr_ref[...], g, precision=hp,
                   preferred_element_type=jnp.float32)
         + bc_ref[...])                                             # (32, T)

    # ---- head: PReLU -> Conv2d(32,_out,1) ∘ BGNorm(_out,1) --------------------
    h = jnp.where(h >= 0.0, h, a_ref[2] * h)
    y = jnp.dot(w3_ref[...], h, precision=hp,
                preferred_element_type=jnp.float32) + b3_ref[...]   # (c_out_pad, T)
    o_ref[...] = y.astype(o_ref.dtype)


def _fold_bn(bn):
    """Eval-mode BatchNorm (single group) -> scalar (scale, shift)."""
    rm, rv, g, b = bn
    s = g / jnp.sqrt(rv + EPS)
    return s, b - rm * s


def reflective_to_emissive(x, params, *, tile_max=TILE_MAX):
    """x: (N, C_in, H, W) float32 -> (N, C_out, H, W)."""
    N, c_in, H, W = x.shape
    c_out = params["w3"].shape[0]
    c_out_pad = _round_up(c_out, 8)
    hw = H * W

    f32 = lambda v: jnp.asarray(v, jnp.float32)

    # --- fold every eval-mode BGNorm into the adjacent conv weights/biases ----
    s1, t1 = _fold_bn(params["bn1"])
    s2, t2 = _fold_bn(params["bn2"])
    sr, tr = _fold_bn(params["bnr"])
    s3, t3 = _fold_bn(params["bn3"])
    s4, t4 = _fold_bn(params["bn4"])

    w0, b0 = f32(params["w0"]), f32(params["b0"])
    w1, b1 = f32(params["w1"]), f32(params["b1"])
    w2, b2 = f32(params["w2"]), f32(params["b2"])
    wr, br = f32(params["wr_dense"]), f32(params["br"])
    w3, b3 = f32(params["w3"]), f32(params["b3"])

    # g = bn1(conv0(x)) = (s1*W0) x + (s1*b0 + t1)
    w0f, b0f = s1 * w0, s1 * b0 + t1
    # bn2(conv1(.)) = (s2*W1) . + (s2*b1 + t2)
    w1f, b1f = s2 * w1, s2 * b1 + t2
    # bn3(main + residual), with residual input recovered from g = s1*h0 + t1:
    #   Wr h0 = (Wr g)/s1 - (t1/s1)*rowsum(Wr)
    w2f = s3 * w2
    wrf = (s3 * sr / s1) * wr
    b_comb = (s3 * b2 + s3 * sr * br + s3 * tr + t3
              - (s3 * sr * t1 / s1) * jnp.sum(wr, axis=1))
    # bn4(conv3(.)) = (s4*W3) . + (s4*b3 + t4)
    w3f, b3f = s4 * w3, s4 * b3 + t4

    # Pad only the tiny head weight/bias so the output block is full-sublane.
    if c_out_pad != c_out:
        w3f = jnp.pad(w3f, ((0, c_out_pad - c_out), (0, 0)))
        b3f = jnp.pad(b3f, ((0, c_out_pad - c_out),))

    # PReLU alphas (num_parameters=1 -> scalar each) ride in SMEM.
    alphas = jnp.stack([f32(params["a1"]), f32(params["a2"]),
                        f32(params["a3"]), jnp.float32(0.0)])

    # Lane-dense view: pixels on the 128-lane axis, channels on sublanes.
    # Pure reshape of a contiguous NCHW array -> no HBM copy, no padding.
    xf = x.reshape(N, c_in, hw)

    # Lane tile: multiple of 128, as large as practical; partial boundary block
    # (if hw % t != 0) is handled by Pallas masking — no pad/slice round trips.
    t = min(tile_max, _round_up(hw, 128))
    grid = (N, pl.cdiv(hw, t))

    col = lambda v: v.reshape(-1, 1)                                 # bias -> (C, 1)
    const = lambda shape: pl.BlockSpec(shape, lambda n, i: (0, 0))   # VMEM-resident weight

    out = pl.pallas_call(
        _r2e_kernel,
        out_shape=jax.ShapeDtypeStruct((N, c_out_pad, hw), x.dtype),
        grid_spec=pltpu.PrefetchScalarGridSpec(
            num_scalar_prefetch=0,
            grid=grid,
            in_specs=[
                pl.BlockSpec(memory_space=pltpu.MemorySpace.SMEM),    # PReLU alphas
                pl.BlockSpec((None, c_in, t), lambda n, i: (n, 0, i)),  # x tile
                const((16, c_in)), const((16, 1)),                    # w0f, b0f
                const((32, 16)),   const((32, 1)),                    # w1f, b1f
                const((32, 32)),                                      # w2f
                const((32, 16)),   const((32, 1)),                    # wrf, b_comb
                const((c_out_pad, 32)), const((c_out_pad, 1)),        # w3f, b3f
            ],
            out_specs=pl.BlockSpec((None, c_out_pad, t), lambda n, i: (n, 0, i)),
        ),
        compiler_params=pltpu.CompilerParams(
            dimension_semantics=("parallel", "parallel")),
    )(alphas, xf,
      w0f, col(b0f),
      w1f, col(b1f),
      w2f,
      wrf, col(b_comb),
      w3f, col(b3f))

    return out[:, :c_out, :].reshape(N, c_out, H, W)


# ------------------------------ reference ------------------------------------
def _ref_forward(x, params):
    """Pure-JAX NCHW reference with the same (eval-mode) semantics."""
    hp = jax.lax.Precision.HIGHEST

    def conv1x1(v, w, b):
        return jnp.einsum("oi,nihw->nohw", w, v, precision=hp) + b[None, :, None, None]

    def bn(v, stats):
        rm, rv, g, b = stats
        return (v - rm) / jnp.sqrt(rv + EPS) * g + b

    def prelu(v, a):
        return jnp.where(v >= 0, v, a * v)

    h = conv1x1(x, params["w0"], params["b0"])
    m = prelu(bn(h, params["bn1"]), params["a1"])
    m = conv1x1(m, params["w1"], params["b1"])
    m = prelu(bn(m, params["bn2"]), params["a2"])
    m = conv1x1(m, params["w2"], params["b2"])
    r = bn(conv1x1(h, params["wr_dense"], params["br"]), params["bnr"])
    h = m + r
    h = prelu(bn(h, params["bn3"]), params["a3"])
    h = conv1x1(h, params["w3"], params["b3"])
    return bn(h, params["bn4"])


def _make_params(key, c_in, c_out):
    ks = jax.random.split(key, 16)
    w = lambda k, o, i: jax.random.normal(k, (o, i), jnp.float32) / jnp.sqrt(i)
    b = lambda k, o: jax.random.normal(k, (o,), jnp.float32) * 0.1

    def bn(k):
        a, bb, c, d = jax.random.split(k, 4)
        return (jax.random.normal(a, (), jnp.float32) * 0.1,                      # running_mean
                jax.random.uniform(bb, (), jnp.float32, minval=0.5, maxval=1.5),  # running_var
                jax.random.uniform(c, (), jnp.float32, minval=0.8, maxval=1.2),   # gamma
                jax.random.normal(d, (), jnp.float32) * 0.1)                      # beta

    # grouped Conv2d(16, 32, 1, groups=16): out channel co uses in channel co//2
    wr = jax.random.normal(ks[8], (32,), jnp.float32)
    wr_dense = jnp.zeros((32, 16), jnp.float32).at[
        jnp.arange(32), jnp.arange(32) // 2].set(wr)

    return dict(
        w0=w(ks[0], 16, c_in), b0=b(ks[1], 16),
        w1=w(ks[2], 32, 16),   b1=b(ks[3], 32),
        w2=w(ks[4], 32, 32),   b2=b(ks[5], 32),
        wr_dense=wr_dense,     br=b(ks[9], 32),
        w3=w(ks[6], c_out, 32), b3=b(ks[7], c_out),
        bn1=bn(ks[10]), bn2=bn(ks[11]), bnr=bn(ks[12]),
        bn3=bn(ks[13]), bn4=bn(ks[14]),
        a1=0.25, a2=0.25, a3=0.25,   # nn.PReLU() default init
    )


if __name__ == "__main__":
    # 6 reflective Sentinel-3 bands in, 3 thermal bands out, batch=2, 16x16.
    N, C_IN, C_OUT, H, W = 2, 6, 3, 16, 16

    key = jax.random.PRNGKey(0)
    kx, kp = jax.random.split(key)
    x = jax.random.normal(kx, (N, C_IN, H, W), dtype=jnp.float32)
    params = _make_params(kp, C_IN, C_OUT)

    fwd = jax.jit(reflective_to_emissive)
    y = fwd(x, params)
    jax.block_until_ready(y)

    y_ref = _ref_forward(x, params)
    assert y.shape == (N, C_OUT, H, W)
    err = float(jnp.max(jnp.abs(y - y_ref)))
    assert jnp.allclose(y, y_ref, atol=2e-3, rtol=2e-3), f"max abs err {err}"

    print("KERNEL_OK")
</pallas_src>

<mosaic_0001>
module attributes {stable_mosaic.version = 11 : i64} {
  func.func @_r2e_kernel(%arg0: i32, %arg1: i32, %arg2: memref<4xf32, #tpu.memory_space<smem>>, %arg3: memref<1x6x256xf32, #tpu.memory_space<vmem>>, %arg4: memref<16x6xf32, #tpu.memory_space<vmem>>, %arg5: memref<16x1xf32, #tpu.memory_space<vmem>>, %arg6: memref<32x16xf32, #tpu.memory_space<vmem>>, %arg7: memref<32x1xf32, #tpu.memory_space<vmem>>, %arg8: memref<32x32xf32, #tpu.memory_space<vmem>>, %arg9: memref<32x16xf32, #tpu.memory_space<vmem>>, %arg10: memref<32x1xf32, #tpu.memory_space<vmem>>, %arg11: memref<8x32xf32, #tpu.memory_space<vmem>>, %arg12: memref<8x1xf32, #tpu.memory_space<vmem>>, %arg13: memref<1x8x256xf32, #tpu.memory_space<vmem>>) attributes {dimension_semantics = [#tpu.dimension_semantics<parallel>, #tpu.dimension_semantics<parallel>], iteration_bounds = array<i64: 2, 1>, scalar_prefetch = 0 : i64, scratch_operands = 0 : i64, tpu.core_type = #tpu.core_type<tc>, window_params = [{transform_indices = @transform_0, window_bounds = array<i64: 4>}, {transform_indices = @transform_1, window_bounds = array<i64: 1, 6, 256>}, {pipeline_mode = #tpu.pipeline_mode<synchronous>, transform_indices = @transform_2, window_bounds = array<i64: 16, 6>}, {pipeline_mode = #tpu.pipeline_mode<synchronous>, transform_indices = @transform_3, window_bounds = array<i64: 16, 1>}, {pipeline_mode = #tpu.pipeline_mode<synchronous>, transform_indices = @transform_4, window_bounds = array<i64: 32, 16>}, {pipeline_mode = #tpu.pipeline_mode<synchronous>, transform_indices = @transform_5, window_bounds = array<i64: 32, 1>}, {pipeline_mode = #tpu.pipeline_mode<synchronous>, transform_indices = @transform_6, window_bounds = array<i64: 32, 32>}, {pipeline_mode = #tpu.pipeline_mode<synchronous>, transform_indices = @transform_7, window_bounds = array<i64: 32, 16>}, {pipeline_mode = #tpu.pipeline_mode<synchronous>, transform_indices = @transform_8, window_bounds = array<i64: 32, 1>}, {pipeline_mode = #tpu.pipeline_mode<synchronous>, transform_indices = @transform_9, window_bounds = array<i64: 8, 32>}, {pipeline_mode = #tpu.pipeline_mode<synchronous>, transform_indices = @transform_10, window_bounds = array<i64: 8, 1>}, {transform_indices = @transform_11, window_bounds = array<i64: 1, 8, 256>}]} {
    %c0 = arith.constant 0 : index
    %c0_0 = arith.constant 0 : index
    %c0_1 = arith.constant 0 : index
    %0 = vector.load %arg3[%c0, %c0_0, %c0_1] : memref<1x6x256xf32, #tpu.memory_space<vmem>>, vector<1x6x256xf32>
    %1 = vector.shape_cast %0 : vector<1x6x256xf32> to vector<6x256xf32>
    %c0_2 = arith.constant 0 : index
    %c0_3 = arith.constant 0 : index
    %2 = vector.load %arg4[%c0_2, %c0_3] : memref<16x6xf32, #tpu.memory_space<vmem>>, vector<16x6xf32>
    %cst = arith.constant dense<0.000000e+00> : vector<16x256xf32>
    %3 = tpu.matmul %2, %1, %cst {dimension_numbers = #tpu.dot_dimension_numbers<[1], [0], [0], [1], [0, 0, 1, 1], [], []>, precision = #tpu.contract_precision<fp32>} : vector<16x6xf32>, vector<6x256xf32>, vector<16x256xf32> -> vector<16x256xf32>
    %c0_4 = arith.constant 0 : index
    %c0_5 = arith.constant 0 : index
    %4 = vector.load %arg5[%c0_4, %c0_5] : memref<16x1xf32, #tpu.memory_space<vmem>>, vector<16x1xf32>
    %5 = vector.broadcast %4 : vector<16x1xf32> to vector<16x256xf32>
    %6 = arith.addf %3, %5 : vector<16x256xf32>
    %cst_6 = arith.constant 0.000000e+00 : f32
    %7 = vector.broadcast %cst_6 : f32 to vector<16x256xf32>
    %8 = arith.cmpf oge, %6, %7 : vector<16x256xf32>
    %c0_7 = arith.constant 0 : index
    %9 = memref.load %arg2[%c0_7] : memref<4xf32, #tpu.memory_space<smem>>
    %10 = vector.broadcast %9 : f32 to vector<16x256xf32>
    %11 = arith.mulf %10, %6 : vector<16x256xf32>
    %12 = arith.select %8, %6, %11 : vector<16x256xi1>, vector<16x256xf32>
    %c0_8 = arith.constant 0 : index
    %c0_9 = arith.constant 0 : index
    %13 = vector.load %arg6[%c0_8, %c0_9] : memref<32x16xf32, #tpu.memory_space<vmem>>, vector<32x16xf32>
    %cst_10 = arith.constant dense<0.000000e+00> : vector<32x256xf32>
    %14 = tpu.matmul %13, %12, %cst_10 {dimension_numbers = #tpu.dot_dimension_numbers<[1], [0], [0], [1], [0, 0, 1, 1], [], []>, precision = #tpu.contract_precision<fp32>} : vector<32x16xf32>, vector<16x256xf32>, vector<32x256xf32> -> vector<32x256xf32>
    %c0_11 = arith.constant 0 : index
    %c0_12 = arith.constant 0 : index
    %15 = vector.load %arg7[%c0_11, %c0_12] : memref<32x1xf32, #tpu.memory_space<vmem>>, vector<32x1xf32>
    %16 = vector.broadcast %15 : vector<32x1xf32> to vector<32x256xf32>
    %17 = arith.addf %14, %16 : vector<32x256xf32>
    %cst_13 = arith.constant 0.000000e+00 : f32
    %18 = vector.broadcast %cst_13 : f32 to vector<32x256xf32>
    %19 = arith.cmpf oge, %17, %18 : vector<32x256xf32>
    %c1 = arith.constant 1 : index
    %20 = memref.load %arg2[%c1] : memref<4xf32, #tpu.memory_space<smem>>
    %21 = vector.broadcast %20 : f32 to vector<32x256xf32>
    %22 = arith.mulf %21, %17 : vector<32x256xf32>
    %23 = arith.select %19, %17, %22 : vector<32x256xi1>, vector<32x256xf32>
    %c0_14 = arith.constant 0 : index
    %c0_15 = arith.constant 0 : index
    %24 = vector.load %arg8[%c0_14, %c0_15] : memref<32x32xf32, #tpu.memory_space<vmem>>, vector<32x32xf32>
    %cst_16 = arith.constant dense<0.000000e+00> : vector<32x256xf32>
    %25 = tpu.matmul %24, %23, %cst_16 {dimension_numbers = #tpu.dot_dimension_numbers<[1], [0], [0], [1], [0, 0, 1, 1], [], []>, precision = #tpu.contract_precision<fp32>} : vector<32x32xf32>, vector<32x256xf32>, vector<32x256xf32> -> vector<32x256xf32>
    %c0_17 = arith.constant 0 : index
    %c0_18 = arith.constant 0 : index
    %26 = vector.load %arg9[%c0_17, %c0_18] : memref<32x16xf32, #tpu.memory_space<vmem>>, vector<32x16xf32>
    %cst_19 = arith.constant dense<0.000000e+00> : vector<32x256xf32>
    %27 = tpu.matmul %26, %6, %cst_19 {dimension_numbers = #tpu.dot_dimension_numbers<[1], [0], [0], [1], [0, 0, 1, 1], [], []>, precision = #tpu.contract_precision<fp32>} : vector<32x16xf32>, vector<16x256xf32>, vector<32x256xf32> -> vector<32x256xf32>
    %28 = arith.addf %25, %27 : vector<32x256xf32>
    %c0_20 = arith.constant 0 : index
    %c0_21 = arith.constant 0 : index
    %29 = vector.load %arg10[%c0_20, %c0_21] : memref<32x1xf32, #tpu.memory_space<vmem>>, vector<32x1xf32>
    %30 = vector.broadcast %29 : vector<32x1xf32> to vector<32x256xf32>
    %31 = arith.addf %28, %30 : vector<32x256xf32>
    %cst_22 = arith.constant 0.000000e+00 : f32
    %32 = vector.broadcast %cst_22 : f32 to vector<32x256xf32>
    %33 = arith.cmpf oge, %31, %32 : vector<32x256xf32>
    %c2 = arith.constant 2 : index
    %34 = memref.load %arg2[%c2] : memref<4xf32, #tpu.memory_space<smem>>
    %35 = vector.broadcast %34 : f32 to vector<32x256xf32>
    %36 = arith.mulf %35, %31 : vector<32x256xf32>
    %37 = arith.select %33, %31, %36 : vector<32x256xi1>, vector<32x256xf32>
    %c0_23 = arith.constant 0 : index
    %c0_24 = arith.constant 0 : index
    %38 = vector.load %arg11[%c0_23, %c0_24] : memref<8x32xf32, #tpu.memory_space<vmem>>, vector<8x32xf32>
    %cst_25 = arith.constant dense<0.000000e+00> : vector<8x256xf32>
    %39 = tpu.matmul %38, %37, %cst_25 {dimension_numbers = #tpu.dot_dimension_numbers<[1], [0], [0], [1], [0, 0, 1, 1], [], []>, precision = #tpu.contract_precision<fp32>} : vector<8x32xf32>, vector<32x256xf32>, vector<8x256xf32> -> vector<8x256xf32>
    %c0_26 = arith.constant 0 : index
    %c0_27 = arith.constant 0 : index
    %40 = vector.load %arg12[%c0_26, %c0_27] : memref<8x1xf32, #tpu.memory_space<vmem>>, vector<8x1xf32>
    %41 = vector.broadcast %40 : vector<8x1xf32> to vector<8x256xf32>
    %42 = arith.addf %39, %41 : vector<8x256xf32>
    %c0_28 = arith.constant 0 : index
    %c0_29 = arith.constant 0 : index
    %c0_30 = arith.constant 0 : index
    %43 = vector.load %arg13[%c0_28, %c0_29, %c0_30] : memref<1x8x256xf32, #tpu.memory_space<vmem>>, vector<1x8x256xf32>
    %44 = vector.shape_cast %43 : vector<1x8x256xf32> to vector<8x256xf32>
    %45 = vector.shape_cast %42 : vector<8x256xf32> to vector<1x8x256xf32>
    tpu.vector_store %arg13[%c0_28, %c0_29, %c0_30], %45 {strides = array<i32>} : memref<1x8x256xf32, #tpu.memory_space<vmem>>, vector<1x8x256xf32>,
    return
  }
  func.func @transform_0(%arg0: i32, %arg1: i32) -> i32 {
    %c0_i32 = arith.constant 0 : i32
    %c0_i32_0 = arith.constant 0 : i32
    return %c0_i32 : i32
  }
  func.func @transform_1(%arg0: i32, %arg1: i32) -> (i32, i32, i32) {
    %c0_i32 = arith.constant 0 : i32
    %c0_i32_0 = arith.constant 0 : i32
    return %arg0, %c0_i32, %arg1 : i32, i32, i32
  }
  func.func @transform_2(%arg0: i32, %arg1: i32) -> (i32, i32) {
    %c0_i32 = arith.constant 0 : i32
    %c0_i32_0 = arith.constant 0 : i32
    %c0_i32_1 = arith.constant 0 : i32
    return %c0_i32, %c0_i32_0 : i32, i32
  }
  func.func @transform_3(%arg0: i32, %arg1: i32) -> (i32, i32) {
    %c0_i32 = arith.constant 0 : i32
    %c0_i32_0 = arith.constant 0 : i32
    %c0_i32_1 = arith.constant 0 : i32
    return %c0_i32, %c0_i32_0 : i32, i32
  }
  func.func @transform_4(%arg0: i32, %arg1: i32) -> (i32, i32) {
    %c0_i32 = arith.constant 0 : i32
    %c0_i32_0 = arith.constant 0 : i32
    %c0_i32_1 = arith.constant 0 : i32
    return %c0_i32, %c0_i32_0 : i32, i32
  }
  func.func @transform_5(%arg0: i32, %arg1: i32) -> (i32, i32) {
    %c0_i32 = arith.constant 0 : i32
    %c0_i32_0 = arith.constant 0 : i32
    %c0_i32_1 = arith.constant 0 : i32
    return %c0_i32, %c0_i32_0 : i32, i32
  }
  func.func @transform_6(%arg0: i32, %arg1: i32) -> (i32, i32) {
    %c0_i32 = arith.constant 0 : i32
    %c0_i32_0 = arith.constant 0 : i32
    %c0_i32_1 = arith.constant 0 : i32
    return %c0_i32, %c0_i32_0 : i32, i32
  }
  func.func @transform_7(%arg0: i32, %arg1: i32) -> (i32, i32) {
    %c0_i32 = arith.constant 0 : i32
    %c0_i32_0 = arith.constant 0 : i32
    %c0_i32_1 = arith.constant 0 : i32
    return %c0_i32, %c0_i32_0 : i32, i32
  }
  func.func @transform_8(%arg0: i32, %arg1: i32) -> (i32, i32) {
    %c0_i32 = arith.constant 0 : i32
    %c0_i32_0 = arith.constant 0 : i32
    %c0_i32_1 = arith.constant 0 : i32
    return %c0_i32, %c0_i32_0 : i32, i32
  }
  func.func @transform_9(%arg0: i32, %arg1: i32) -> (i32, i32) {
    %c0_i32 = arith.constant 0 : i32
    %c0_i32_0 = arith.constant 0 : i32
    %c0_i32_1 = arith.constant 0 : i32
    return %c0_i32, %c0_i32_0 : i32, i32
  }
  func.func @transform_10(%arg0: i32, %arg1: i32) -> (i32, i32) {
    %c0_i32 = arith.constant 0 : i32
    %c0_i32_0 = arith.constant 0 : i32
    %c0_i32_1 = arith.constant 0 : i32
    return %c0_i32, %c0_i32_0 : i32, i32
  }
  func.func @transform_11(%arg0: i32, %arg1: i32) -> (i32, i32, i32) {
    %c0_i32 = arith.constant 0 : i32
    %c0_i32_0 = arith.constant 0 : i32
    return %arg0, %c0_i32, %arg1 : i32, i32, i32
  }
}

</mosaic_0001>

<llo_original>
// kernel: reflective_to_emissive.1
$region0: #{reflective_to_emissive.1}
  #allocation0 [shape = 'u32[]', space=smem, size = 0x4, offset = 0x4, fixed_abs, tag = 'smem constant byte address 0x4 - core index']
  #allocation1 [shape = 'u32[72,128]{1,0:T(1,128)}', space=vmem, size = 0x9000, scoped, tag = 'internal scratch']
  %s0 = inlined_call_operand.vmem [shape: f32[4], index: 0, kind: input, shape index: {}]
  %s1 = inlined_call_operand.vmem [shape: f32[2,6,256], index: 1, kind: input, shape index: {}]
  %s2 = inlined_call_operand.vmem [shape: f32[16,6], index: 2, kind: input, shape index: {}]
  %s3 = inlined_call_operand.vmem [shape: f32[16,1], index: 3, kind: input, shape index: {}]
  %s4 = inlined_call_operand.vmem [shape: f32[32,16], index: 4, kind: input, shape index: {}]
  %s5 = inlined_call_operand.vmem [shape: f32[32,1], index: 5, kind: input, shape index: {}]
  %s6 = inlined_call_operand.vmem [shape: f32[32,32], index: 6, kind: input, shape index: {}]
  %s7 = inlined_call_operand.vmem [shape: f32[32,16], index: 7, kind: input, shape index: {}]
  %s8 = inlined_call_operand.vmem [shape: f32[32,1], index: 8, kind: input, shape index: {}]
  %s9 = inlined_call_operand.vmem [shape: f32[8,32], index: 9, kind: input, shape index: {}]
  %s10 = inlined_call_operand.vmem [shape: f32[8,1], index: 10, kind: input, shape index: {}]
  %s11 = inlined_call_operand.vmem [shape: f32[2,8,256], index: 11, kind: output, shape index: {}]
  %s12 = sld [smem:[#allocation0]]
  $region81: #{reflective_to_emissive.1} parent=0
    _
  %s14 = ssub.s32 1, %s12
  %s15 = scalar_select 0, %s14, %s12
  $region1: #{reflective_to_emissive.1} parent=0
    #allocation2 [shape = 'u8[512]{0}', space=smem, size = 0x200, scoped, tag = 'input window, operand 0, single buffered']
    #allocation3 [shape = 's32[2]{0}', space=sflag, size = 0x8, scoped, tag = 'scoped memory for reflective_to_emissive.1']
    %16 = vsyncpa [#allocation3], 0
    loop: start=0, step=1, limit=4
    $region2: #{reflective_to_emissive.1} parent=1 // loop_pre_header
      _
    $region3: #{reflective_to_emissive.1} parent=1 // loop_header
      %s18 = sphi 0, %s22
      %p19 = scmp.ge.s32.totalorder %s18, 4
      %s25 = sphi 0, %s37
      %s26 = sphi 0, %s33
      %s27 = sphi 0, %s25
      %s28 = sphi 0, %s26
      %s29 = sphi 0, %s27
      %s30 = sphi 0, %s28
      %s38 = sphi 0, %s38
      %s40 = sphi 0, %s38
      %s41 = sphi 0, %s40
      %s55 = sphi 0, %s41
      %s63 = sphi 0, %s65
      %s66 = sphi 0, %s63
      %s67 = sphi 0, %s66
      %s83 = sphi 0, %s67
      %s87 = sphi 0, %s87
      %s89 = sphi 0, %s87
      %s90 = sphi 0, %s89
      %s104 = sphi 0, %s90
      %s108 = sphi 0, %s108
      %s110 = sphi 0, %s108
      %s111 = sphi 0, %s110
      %s125 = sphi 0, %s111
      %s129 = sphi 0, %s129
      %s131 = sphi 0, %s129
      %s132 = sphi 0, %s131
      %s146 = sphi 0, %s132
      %s150 = sphi 0, %s150
      %s152 = sphi 0, %s150
      %s153 = sphi 0, %s152
      %s167 = sphi 0, %s153
      %s171 = sphi 0, %s171
      %s173 = sphi 0, %s171
      %s174 = sphi 0, %s173
      %s188 = sphi 0, %s174
      %s192 = sphi 0, %s192
      %s194 = sphi 0, %s192
      %s195 = sphi 0, %s194
      %s209 = sphi 0, %s195
      %s213 = sphi 0, %s213
      %s215 = sphi 0, %s213
      %s216 = sphi 0, %s215
      %s230 = sphi 0, %s216
      %s234 = sphi 0, %s234
      %s236 = sphi 0, %s234
      %s237 = sphi 0, %s236
      %s251 = sphi 0, %s237
      %s255 = sphi 0, %s255
      %s257 = sphi 0, %s255
      %s258 = sphi 0, %s257
      %s272 = sphi 0, %s258
      %s280 = sphi 0, %s282
      %s283 = sphi 0, %s280
      %s284 = sphi 0, %s283
      %s300 = sphi 0, %s284
    $region4: #{reflective_to_emissive.1} parent=1 // loop_header_branch
      %21 = sbr.rel (%p19) target = $region8
    $region5: #{reflective_to_emissive.1} parent=1 // loop_body
      %s23 = ssub.s32 %s18, 1
      %s24 = ssub.s32 %s18, 2
      %s31 = sadd.s32 1, %s26
      %p32 = scmp.ge.s32.totalorder %s31, 1
      %s33 = scalar_select %p32, 0, %s31
      %s34 = sadd.s32 1, %s25
      %s35 = scalar_select %p32, %s34, %s25
      %p36 = scmp.ge.s32.totalorder %s35, 2
      %s37 = scalar_select %p36, 0, %s35
      %s39 = sadd.s32 %s38, 1
      %p42 = scmp.eq.s32.totalorder %s18, 1
      %p43 = scmp.ne.s32.totalorder %s38, %s40
      %p44 = scmp.eq.s32.totalorder %s18, 0
      %p45 = por %p43, %p44
      %p46 = scmp.ne.s32.totalorder %s38, %s40
      %p47 = scmp.eq.s32.totalorder %s23, 1
      %p48 = por %p46, %p47
      %p49 = scmp.ne.s32.totalorder %s40, %s41
      %p50 = scmp.eq.s32.totalorder %s23, 0
      %p51 = por %p49, %p50
      %p52 = scmp.ne.s32.totalorder %s40, %s41
      %p53 = scmp.eq.s32.totalorder %s24, 1
      %p54 = por %p52, %p53
      %p56 = scmp.ne.s32.totalorder %s41, %s55
      %p57 = scmp.eq.s32.totalorder %s24, 0
      %p58 = por %p56, %p57
      %s59 = ssub.s32 %s25, %s37
      %s60 = ssub.s32 %s26, %s33
      %s61 = sor.u32 %s59, %s60
      %p62 = scmp.eq.s32.totalorder %s61, 0
      %s64 = sadd.s32 %s63, 1
      %s65 = scalar_select %p62, %s63, %s64
      %p68 = pneg %p62
      %p69 = scmp.eq.s32.totalorder %s18, 1
      %p70 = por %p68, %p69
      %p71 = scmp.ne.s32.totalorder %s63, %s66
      %p72 = scmp.eq.s32.totalorder %s18, 0
      %p73 = por %p71, %p72
      %p74 = scmp.ne.s32.totalorder %s63, %s66
      %p75 = scmp.eq.s32.totalorder %s23, 1
      %p76 = por %p74, %p75
      %p77 = scmp.ne.s32.totalorder %s66, %s67
      %p78 = scmp.eq.s32.totalorder %s23, 0
      %p79 = por %p77, %p78
      %p80 = scmp.ne.s32.totalorder %s66, %s67
      %p81 = scmp.eq.s32.totalorder %s24, 1
      %p82 = por %p80, %p81
      %p84 = scmp.ne.s32.totalorder %s67, %s83
      %p85 = scmp.eq.s32.totalorder %s24, 0
      %p86 = por %p84, %p85
      %s88 = sadd.s32 %s87, 1
      %p91 = scmp.eq.s32.totalorder %s18, 1
      %p92 = scmp.ne.s32.totalorder %s87, %s89
      %p93 = scmp.eq.s32.totalorder %s18, 0
      %p94 = por %p92, %p93
      %p95 = scmp.ne.s32.totalorder %s87, %s89
      %p96 = scmp.eq.s32.totalorder %s23, 1
      %p97 = por %p95, %p96
      %p98 = scmp.ne.s32.totalorder %s89, %s90
      %p99 = scmp.eq.s32.totalorder %s23, 0
      %p100 = por %p98, %p99
      %p101 = scmp.ne.s32.totalorder %s89, %s90
      %p102 = scmp.eq.s32.totalorder %s24, 1
      %p103 = por %p101, %p102
      %p105 = scmp.ne.s32.totalorder %s90, %s104
      %p106 = scmp.eq.s32.totalorder %s24, 0
      %p107 = por %p105, %p106
      %s109 = sadd.s32 %s108, 1
      %p112 = scmp.eq.s32.totalorder %s18, 1
      %p113 = scmp.ne.s32.totalorder %s108, %s110
      %p114 = scmp.eq.s32.totalorder %s18, 0
      %p115 = por %p113, %p114
      %p116 = scmp.ne.s32.totalorder %s108, %s110
      %p117 = scmp.eq.s32.totalorder %s23, 1
      %p118 = por %p116, %p117
      %p119 = scmp.ne.s32.totalorder %s110, %s111
      %p120 = scmp.eq.s32.totalorder %s23, 0
      %p121 = por %p119, %p120
      %p122 = scmp.ne.s32.totalorder %s110, %s111
      %p123 = scmp.eq.s32.totalorder %s24, 1
      %p124 = por %p122, %p123
      %p126 = scmp.ne.s32.totalorder %s111, %s125
      %p127 = scmp.eq.s32.totalorder %s24, 0
      %p128 = por %p126, %p127
      %s130 = sadd.s32 %s129, 1
      %p133 = scmp.eq.s32.totalorder %s18, 1
      %p134 = scmp.ne.s32.totalorder %s129, %s131
      %p135 = scmp.eq.s32.totalorder %s18, 0
      %p136 = por %p134, %p135
      %p137 = scmp.ne.s32.totalorder %s129, %s131
      %p138 = scmp.eq.s32.totalorder %s23, 1
      %p139 = por %p137, %p138
      %p140 = scmp.ne.s32.totalorder %s131, %s132
      %p141 = scmp.eq.s32.totalorder %s23, 0
      %p142 = por %p140, %p141
      %p143 = scmp.ne.s32.totalorder %s131, %s132
      %p144 = scmp.eq.s32.totalorder %s24, 1
      %p145 = por %p143, %p144
      %p147 = scmp.ne.s32.totalorder %s132, %s146
      %p148 = scmp.eq.s32.totalorder %s24, 0
      %p149 = por %p147, %p148
      %s151 = sadd.s32 %s150, 1
      %p154 = scmp.eq.s32.totalorder %s18, 1
      %p155 = scmp.ne.s32.totalorder %s150, %s152
      %p156 = scmp.eq.s32.totalorder %s18, 0
      %p157 = por %p155, %p156
      %p158 = scmp.ne.s32.totalorder %s150, %s152
      %p159 = scmp.eq.s32.totalorder %s23, 1
      %p160 = por %p158, %p159
      %p161 = scmp.ne.s32.totalorder %s152, %s153
      %p162 = scmp.eq.s32.totalorder %s23, 0
      %p163 = por %p161, %p162
      %p164 = scmp.ne.s32.totalorder %s152, %s153
      %p165 = scmp.eq.s32.totalorder %s24, 1
      %p166 = por %p164, %p165
      %p168 = scmp.ne.s32.totalorder %s153, %s167
      %p169 = scmp.eq.s32.totalorder %s24, 0
      %p170 = por %p168, %p169
      %s172 = sadd.s32 %s171, 1
      %p175 = scmp.eq.s32.totalorder %s18, 1
      %p176 = scmp.ne.s32.totalorder %s171, %s173
      %p177 = scmp.eq.s32.totalorder %s18, 0
      %p178 = por %p176, %p177
      %p179 = scmp.ne.s32.totalorder %s171, %s173
      %p180 = scmp.eq.s32.totalorder %s23, 1
      %p181 = por %p179, %p180
      %p182 = scmp.ne.s32.totalorder %s173, %s174
      %p183 = scmp.eq.s32.totalorder %s23, 0
      %p184 = por %p182, %p183
      %p185 = scmp.ne.s32.totalorder %s173, %s174
      %p186 = scmp.eq.s32.totalorder %s24, 1
      %p187 = por %p185, %p186
      %p189 = scmp.ne.s32.totalorder %s174, %s188
      %p190 = scmp.eq.s32.totalorder %s24, 0
      %p191 = por %p189, %p190
      %s193 = sadd.s32 %s192, 1
      %p196 = scmp.eq.s32.totalorder %s18, 1
      %p197 = scmp.ne.s32.totalorder %s192, %s194
      %p198 = scmp.eq.s32.totalorder %s18, 0
      %p199 = por %p197, %p198
      %p200 = scmp.ne.s32.totalorder %s192, %s194
      %p201 = scmp.eq.s32.totalorder %s23, 1
      %p202 = por %p200, %p201
      %p203 = scmp.ne.s32.totalorder %s194, %s195
      %p204 = scmp.eq.s32.totalorder %s23, 0
      %p205 = por %p203, %p204
      %p206 = scmp.ne.s32.totalorder %s194, %s195
      %p207 = scmp.eq.s32.totalorder %s24, 1
      %p208 = por %p206, %p207
      %p210 = scmp.ne.s32.totalorder %s195, %s209
      %p211 = scmp.eq.s32.totalorder %s24, 0
      %p212 = por %p210, %p211
      %s214 = sadd.s32 %s213, 1
      %p217 = scmp.eq.s32.totalorder %s18, 1
      %p218 = scmp.ne.s32.totalorder %s213, %s215
      %p219 = scmp.eq.s32.totalorder %s18, 0
      %p220 = por %p218, %p219
      %p221 = scmp.ne.s32.totalorder %s213, %s215
      %p222 = scmp.eq.s32.totalorder %s23, 1
      %p223 = por %p221, %p222
      %p224 = scmp.ne.s32.totalorder %s215, %s216
      %p225 = scmp.eq.s32.totalorder %s23, 0
      %p226 = por %p224, %p225
      %p227 = scmp.ne.s32.totalorder %s215, %s216
      %p228 = scmp.eq.s32.totalorder %s24, 1
      %p229 = por %p227, %p228
      %p231 = scmp.ne.s32.totalorder %s216, %s230
      %p232 = scmp.eq.s32.totalorder %s24, 0
      %p233 = por %p231, %p232
      %s235 = sadd.s32 %s234, 1
      %p238 = scmp.eq.s32.totalorder %s18, 1
      %p239 = scmp.ne.s32.totalorder %s234, %s236
      %p240 = scmp.eq.s32.totalorder %s18, 0
      %p241 = por %p239, %p240
      %p242 = scmp.ne.s32.totalorder %s234, %s236
      %p243 = scmp.eq.s32.totalorder %s23, 1
      %p244 = por %p242, %p243
      %p245 = scmp.ne.s32.totalorder %s236, %s237
      %p246 = scmp.eq.s32.totalorder %s23, 0
      %p247 = por %p245, %p246
      %p248 = scmp.ne.s32.totalorder %s236, %s237
      %p249 = scmp.eq.s32.totalorder %s24, 1
      %p250 = por %p248, %p249
      %p252 = scmp.ne.s32.totalorder %s237, %s251
      %p253 = scmp.eq.s32.totalorder %s24, 0
      %p254 = por %p252, %p253
      %s256 = sadd.s32 %s255, 1
      %p259 = scmp.eq.s32.totalorder %s18, 1
      %p260 = scmp.ne.s32.totalorder %s255, %s257
      %p261 = scmp.eq.s32.totalorder %s18, 0
      %p262 = por %p260, %p261
      %p263 = scmp.ne.s32.totalorder %s255, %s257
      %p264 = scmp.eq.s32.totalorder %s23, 1
      %p265 = por %p263, %p264
      %p266 = scmp.ne.s32.totalorder %s257, %s258
      %p267 = scmp.eq.s32.totalorder %s23, 0
      %p268 = por %p266, %p267
      %p269 = scmp.ne.s32.totalorder %s257, %s258
      %p270 = scmp.eq.s32.totalorder %s24, 1
      %p271 = por %p269, %p270
      %p273 = scmp.ne.s32.totalorder %s258, %s272
      %p274 = scmp.eq.s32.totalorder %s24, 0
      %p275 = por %p273, %p274
      %s276 = ssub.s32 %s25, %s37
      %s277 = ssub.s32 %s26, %s33
      %s278 = sor.u32 %s276, %s277
      %p279 = scmp.eq.s32.totalorder %s278, 0
      %s281 = sadd.s32 %s280, 1
      %s282 = scalar_select %p279, %s280, %s281
      %p285 = pneg %p279
      %p286 = scmp.eq.s32.totalorder %s18, 1
      %p287 = por %p285, %p286
      %p288 = scmp.ne.s32.totalorder %s280, %s283
      %p289 = scmp.eq.s32.totalorder %s18, 0
      %p290 = por %p288, %p289
      %p291 = scmp.ne.s32.totalorder %s280, %s283
      %p292 = scmp.eq.s32.totalorder %s23, 1
      %p293 = por %p291, %p292
      %p294 = scmp.ne.s32.totalorder %s283, %s284
      %p295 = scmp.eq.s32.totalorder %s23, 0
      %p296 = por %p294, %p295
      %p297 = scmp.ne.s32.totalorder %s283, %s284
      %p298 = scmp.eq.s32.totalorder %s24, 1
      %p299 = por %p297, %p298
      %p301 = scmp.ne.s32.totalorder %s284, %s300
      %p302 = scmp.eq.s32.totalorder %s24, 0
      %p303 = por %p301, %p302
      %p304 = scmp.le.s32.totalorder 1, %s18
      %p305 = scmp.lt.s32.totalorder %s18, 3
      %p306 = pnand %p304, %p305
      %p307 = pneg %p306
      // Predicated region
      $region9: #{reflective_to_emissive.1} parent=5 // pred_check
        _
      $region10: #{reflective_to_emissive.1} parent=5 // pred_check_branch
        %309 = sbr.rel (%p306) target = $region12
      $region11: #{reflective_to_emissive.1} parent=5 // pred_region
        %s310 = ssub.s32 %s18, 1
        // Predicated region
        $region13: #{reflective_to_emissive.1} parent=11 // pred_check
          %p311 = pneg %p51
        $region14: #{reflective_to_emissive.1} parent=11 // pred_check_branch
          %313 = sbr.rel (%p311) target = $region16
        $region15: #{reflective_to_emissive.1} parent=11 // pred_region
          %315 = vsyncadd [#allocation3], 0
          %s317 = sshll.u32 %s0, 4
          %s318 = int_to_ptr.vmem [resolvable:$true] %s317
          %320 = dma.vmem_to_smem %s318, 16, [#allocation2], [#allocation3]
        $region16: #{reflective_to_emissive.1} parent=11 // pred_fallthru
          _
        // Predicated region
        $region17: #{reflective_to_emissive.1} parent=11 // pred_check
          %p321 = pneg %p100
        $region18: #{reflective_to_emissive.1} parent=11 // pred_check_branch
          %323 = sbr.rel (%p321) target = $region20
        $region19: #{reflective_to_emissive.1} parent=11 // pred_region
          _
        $region20: #{reflective_to_emissive.1} parent=11 // pred_fallthru
          _
        // Predicated region
        $region21: #{reflective_to_emissive.1} parent=11 // pred_check
          %p324 = pneg %p121
        $region22: #{reflective_to_emissive.1} parent=11 // pred_check_branch
          %326 = sbr.rel (%p324) target = $region24
        $region23: #{reflective_to_emissive.1} parent=11 // pred_region
          _
        $region24: #{reflective_to_emissive.1} parent=11 // pred_fallthru
          _
        // Predicated region
        $region25: #{reflective_to_emissive.1} parent=11 // pred_check
          %p327 = pneg %p142
        $region26: #{reflective_to_emissive.1} parent=11 // pred_check_branch
          %329 = sbr.rel (%p327) target = $region28
        $region27: #{reflective_to_emissive.1} parent=11 // pred_region
          _
        $region28: #{reflective_to_emissive.1} parent=11 // pred_fallthru
          _
        // Predicated region
        $region29: #{reflective_to_emissive.1} parent=11 // pred_check
          %p330 = pneg %p163
        $region30: #{reflective_to_emissive.1} parent=11 // pred_check_branch
          %332 = sbr.rel (%p330) target = $region32
        $region31: #{reflective_to_emissive.1} parent=11 // pred_region
          _
        $region32: #{reflective_to_emissive.1} parent=11 // pred_fallthru
          _
        // Predicated region
        $region33: #{reflective_to_emissive.1} parent=11 // pred_check
          %p333 = pneg %p184
        $region34: #{reflective_to_emissive.1} parent=11 // pred_check_branch
          %335 = sbr.rel (%p333) target = $region36
        $region35: #{reflective_to_emissive.1} parent=11 // pred_region
          _
        $region36: #{reflective_to_emissive.1} parent=11 // pred_fallthru
          _
        // Predicated region
        $region37: #{reflective_to_emissive.1} parent=11 // pred_check
          %p336 = pneg %p205
        $region38: #{reflective_to_emissive.1} parent=11 // pred_check_branch
          %338 = sbr.rel (%p336) target = $region40
        $region39: #{reflective_to_emissive.1} parent=11 // pred_region
          _
        $region40: #{reflective_to_emissive.1} parent=11 // pred_fallthru
          _
        // Predicated region
        $region41: #{reflective_to_emissive.1} parent=11 // pred_check
          %p339 = pneg %p226
        $region42: #{reflective_to_emissive.1} parent=11 // pred_check_branch
          %341 = sbr.rel (%p339) target = $region44
        $region43: #{reflective_to_emissive.1} parent=11 // pred_region
          _
        $region44: #{reflective_to_emissive.1} parent=11 // pred_fallthru
          _
        // Predicated region
        $region45: #{reflective_to_emissive.1} parent=11 // pred_check
          %p342 = pneg %p247
        $region46: #{reflective_to_emissive.1} parent=11 // pred_check_branch
          %344 = sbr.rel (%p342) target = $region48
        $region47: #{reflective_to_emissive.1} parent=11 // pred_region
          _
        $region48: #{reflective_to_emissive.1} parent=11 // pred_fallthru
          _
        // Predicated region
        $region49: #{reflective_to_emissive.1} parent=11 // pred_check
          %p345 = pneg %p268
        $region50: #{reflective_to_emissive.1} parent=11 // pred_check_branch
          %347 = sbr.rel (%p345) target = $region52
        $region51: #{reflective_to_emissive.1} parent=11 // pred_region
          _
        $region52: #{reflective_to_emissive.1} parent=11 // pred_fallthru
          _
      $region12: #{reflective_to_emissive.1} parent=5 // pred_fallthru
        _
      %p348 = scmp.lt.s32.totalorder %s18, 2
      // Predicated region
      $region53: #{reflective_to_emissive.1} parent=5 // pred_check
        %p349 = pneg %p348
      $region54: #{reflective_to_emissive.1} parent=5 // pred_check_branch
        %351 = sbr.rel (%p349) target = $region56
      $region55: #{reflective_to_emissive.1} parent=5 // pred_region
        // Predicated region
        $region57: #{reflective_to_emissive.1} parent=55 // pred_check
          %p352 = pneg %p73
        $region58: #{reflective_to_emissive.1} parent=55 // pred_check_branch
          %354 = sbr.rel (%p352) target = $region60
        $region59: #{reflective_to_emissive.1} parent=55 // pred_region
          %s355 = smul.u32 2, %s26
          %p356 = scmp.lt.s32.totalorder %s25, 1
          %s357 = scalar_select %p356, %s25, 1
          %p358 = scmp.lt.s32.totalorder %s355, 1
          %s359 = scalar_select %p358, %s355, 1
          %s360 = smul.addr %s357, 2
          %s361 = sadd.s32 %s359, %s360
          %s362 = smul.addr %s361, 8
          %s363 = scalar_lea.vmem %s1, %s362
          %s364 = smul.u32 2, %s26
        $region60: #{reflective_to_emissive.1} parent=55 // pred_fallthru
          _
      $region56: #{reflective_to_emissive.1} parent=5 // pred_fallthru
        _
      %p365 = scmp.le.s32.totalorder 1, %s18
      %p366 = scmp.lt.s32.totalorder %s18, 3
      %p367 = pnand %p365, %p366
      %p368 = pneg %p367
      // Predicated region
      $region61: #{reflective_to_emissive.1} parent=5 // pred_check
        _
      $region62: #{reflective_to_emissive.1} parent=5 // pred_check_branch
        %370 = sbr.rel (%p367) target = $region64
      $region63: #{reflective_to_emissive.1} parent=5 // pred_region
        %s371 = ssub.s32 %s18, 1
        // Predicated region
        $region65: #{reflective_to_emissive.1} parent=63 // pred_check
          %p372 = pneg %p51
        $region66: #{reflective_to_emissive.1} parent=63 // pred_check_branch
          %374 = sbr.rel (%p372) target = $region68
        $region67: #{reflective_to_emissive.1} parent=63 // pred_region
          %376 = dma.done [#allocation3], 16
        $region68: #{reflective_to_emissive.1} parent=63 // pred_fallthru
          _
        %377 = sfence
        %p378 = pneg %p51
        %p379 = pneg %p48
        %s380 = smul.u32 2, %s28
        %p381 = scmp.lt.s32.totalorder %s27, 1
        %s382 = scalar_select %p381, %s27, 1
        %p383 = scmp.lt.s32.totalorder %s380, 1
        %s384 = scalar_select %p383, %s380, 1
        %s385 = smul.addr %s382, 2
        %s386 = sadd.s32 %s384, %s385
        %s387 = smul.addr %s386, 8
        %s388 = scalar_lea.vmem %s1, %s387
        %p389 = pneg %p79
        %p390 = pneg %p76
        %p391 = pneg %p100
        %p392 = pneg %p97
        %p393 = pneg %p121
        %p394 = pneg %p118
        %p395 = pneg %p142
        %p396 = pneg %p139
        %p397 = pneg %p163
        %p398 = pneg %p160
        %p399 = pneg %p184
        %p400 = pneg %p181
        %p401 = pneg %p205
        %p402 = pneg %p202
        %p403 = pneg %p226
        %p404 = pneg %p223
        %p405 = pneg %p247
        %p406 = pneg %p244
        %p407 = pneg %p268
        %p408 = pneg %p265
        %p409 = pneg %p296
        %p410 = pneg %p293
        %s411 = smul.u32 2, %s28
        %p412 = scmp.lt.s32.totalorder %s27, 1
        %s413 = scalar_select %p412, %s27, 1
        %p414 = scmp.lt.s32.totalorder %s411, 1
        %s415 = scalar_select %p414, %s411, 1
        %s416 = smul.addr %s413, 2
        %s417 = sadd.s32 %s415, %s416
        %s418 = smul.addr %s417, 8
        %s419 = scalar_lea.vmem %s11, %s418
        %s420 = smul.u32 2, %s28
        %p421 = scmp.lt.s32.totalorder %s27, 1
        %s422 = scalar_select %p421, %s27, 1
        %p423 = scmp.lt.s32.totalorder %s420, 1
        %s424 = scalar_select %p423, %s420, 1
        %s425 = smul.addr %s422, 2
        %s426 = sadd.s32 %s424, %s425
        %s427 = smul.addr %s426, 8
        %s428 = scalar_lea.vmem %s1, %s427
        %s429 = smul.u32 2, %s28
        %s430 = smul.u32 2, %s28
        %p431 = scmp.lt.s32.totalorder %s27, 1
        %s432 = scalar_select %p431, %s27, 1
        %p433 = scmp.lt.s32.totalorder %s430, 1
        %s434 = scalar_select %p433, %s430, 1
        %s435 = smul.addr %s432, 2
        %s436 = sadd.s32 %s434, %s435
        %s437 = smul.addr %s436, 8
        %s438 = scalar_lea.vmem %s11, %s437
        %s439 = smul.u32 2, %s28
        %v440 = vld [vmem:[%s428] sm:$0x3f]
        %v441 = vld [vmem:[%s428 + $0x8] sm:$0x3f]
        %v442 = vld [vmem:[%s2] sm:$0xff]
        %v443 = vld [vmem:[%s2 + $0x8] sm:$0xff]
        %v444 = vld [vmem:[%s3] sm:$0xff]
        %v445 = vld [vmem:[%s3 + $0x8] sm:$0xff]
        %447 = vset.pattern.permute.xlu0 0
        %448 = vperm.xlu0 %447, %v444
        %v449 = vpop.permute.xlu0 %448
        %452 = vset.pattern.permute.xlu0 0
        %453 = vperm.xlu0 %452, %v445
        %v454 = vpop.permute.xlu0 %453
        %vm456 = vcmask 48128
        %v458 = vsel %vm456, %v442, 0
        %v461 = vsel %vm456, %v443, 0
        %vm463 = vcmask 1045504
        %v465 = vsel %vm463, %v440, 0
        %v468 = vsel %vm463, %v441, 0
        %470 = vmatpush.msra.mxu0 0.0
        %471 = vmatpush.msra.mxu0 0.0
        %472 = vmatpush.msra.mxu0 0.0
        %473 = vmatpush.msra.mxu0 0.0
        %474 = vmatpush.msra.mxu0 0.0
        %475 = vmatpush.msra.mxu0 0.0
        %476 = vmatpush.msra.mxu0 0.0
        %477 = vmatpush.msra.mxu0 0.0
        %478 = vmatpush.msra.mxu0 0.0
        %479 = vmatpush.msra.mxu0 0.0
        %480 = vmatpush.msra.mxu0 0.0
        %481 = vmatpush.msra.mxu0 0.0
        %482 = vmatpush.msra.mxu0 0.0
        %483 = vmatpush.msra.mxu0 0.0
        %484 = vmatpush.msra.mxu0 0.0
        %v485 = vand.u32 %v465, 4294901760
        %486 = vmatpush.msra.mxu0 %v485
        %v487 = vand.u32 %v458, 4294901760
        %v488 = vsub.f32 %v458, %v487
        %v489 = vand.u32 %v488, 4294901760
        %v490 = vsub.f32 %v488, %v489
        %v491 = vand.u32 %v490, 4294901760
        %492 = vmatmul.f32.gmra.mxu0 %v491
        %v493 = vpop.f32.mrf.mxu0
        %v494 = vadd.f32 %v449, %v493
        %v495 = vand.u32 %v461, 4294901760
        %v496 = vsub.f32 %v461, %v495
        %v497 = vand.u32 %v496, 4294901760
        %v498 = vsub.f32 %v496, %v497
        %v499 = vand.u32 %v498, 4294901760
        %500 = vmatmul.f32.gmra.mxu0 %v499
        %v501 = vpop.f32.mrf.mxu0
        %v502 = vadd.f32 %v454, %v501
        %503 = vdwg.mxu0
        %504 = vmatpush.msra.mxu0 0.0
        %505 = vmatpush.msra.mxu0 0.0
        %506 = vmatpush.msra.mxu0 0.0
        %507 = vmatpush.msra.mxu0 0.0
        %508 = vmatpush.msra.mxu0 0.0
        %509 = vmatpush.msra.mxu0 0.0
        %510 = vmatpush.msra.mxu0 0.0
        %511 = vmatpush.msra.mxu0 0.0
        %512 = vmatpush.msra.mxu0 0.0
        %513 = vmatpush.msra.mxu0 0.0
        %514 = vmatpush.msra.mxu0 0.0
        %515 = vmatpush.msra.mxu0 0.0
        %516 = vmatpush.msra.mxu0 0.0
        %517 = vmatpush.msra.mxu0 0.0
        %518 = vmatpush.msra.mxu0 0.0
        %v519 = vand.u32 %v465, 4294901760
        %v520 = vsub.f32 %v465, %v519
        %v521 = vand.u32 %v520, 4294901760
        %v522 = vsub.f32 %v520, %v521
        %v523 = vand.u32 %v522, 4294901760
        %524 = vmatpush.msra.mxu0 %v523
        %v525 = vand.u32 %v458, 4294901760
        %526 = vmatmul.f32.gmra.mxu0 %v525
        %v527 = vpop.f32.mrf.mxu0
        %v528 = vadd.f32 %v494, %v527
        %v529 = vand.u32 %v461, 4294901760
        %530 = vmatmul.f32.gmra.mxu0 %v529
        %v531 = vpop.f32.mrf.mxu0
        %v532 = vadd.f32 %v502, %v531
        %533 = vdwg.mxu0
        %534 = vmatpush.msra.mxu0 0.0
        %535 = vmatpush.msra.mxu0 0.0
        %536 = vmatpush.msra.mxu0 0.0
        %537 = vmatpush.msra.mxu0 0.0
        %538 = vmatpush.msra.mxu0 0.0
        %539 = vmatpush.msra.mxu0 0.0
        %540 = vmatpush.msra.mxu0 0.0
        %541 = vmatpush.msra.mxu0 0.0
        %542 = vmatpush.msra.mxu0 0.0
        %543 = vmatpush.msra.mxu0 0.0
        %544 = vmatpush.msra.mxu0 0.0
        %545 = vmatpush.msra.mxu0 0.0
        %546 = vmatpush.msra.mxu0 0.0
        %547 = vmatpush.msra.mxu0 0.0
        %548 = vmatpush.msra.mxu0 0.0
        %v549 = vand.u32 %v465, 4294901760
        %v550 = vsub.f32 %v465, %v549
        %551 = vmatpush.msra.mxu0 %v550
        %v552 = vand.u32 %v458, 4294901760
        %v553 = vsub.f32 %v458, %v552
        %554 = vmatmul.f32.gmra.mxu0 %v553
        %v555 = vpop.f32.mrf.mxu0
        %v556 = vadd.f32 %v528, %v555
        %v557 = vand.u32 %v461, 4294901760
        %v558 = vsub.f32 %v461, %v557
        %559 = vmatmul.f32.gmra.mxu0 %v558
        %v560 = vpop.f32.mrf.mxu0
        %v561 = vadd.f32 %v532, %v560
        %562 = vdwg.mxu0
        %563 = vmatpush.msra.mxu0 0.0
        %564 = vmatpush.msra.mxu0 0.0
        %565 = vmatpush.msra.mxu0 0.0
        %566 = vmatpush.msra.mxu0 0.0
        %567 = vmatpush.msra.mxu0 0.0
        %568 = vmatpush.msra.mxu0 0.0
        %569 = vmatpush.msra.mxu0 0.0
        %570 = vmatpush.msra.mxu0 0.0
        %571 = vmatpush.msra.mxu0 0.0
        %572 = vmatpush.msra.mxu0 0.0
        %573 = vmatpush.msra.mxu0 0.0
        %574 = vmatpush.msra.mxu0 0.0
        %575 = vmatpush.msra.mxu0 0.0
        %576 = vmatpush.msra.mxu0 0.0
        %577 = vmatpush.msra.mxu0 0.0
        %v578 = vand.u32 %v465, 4294901760
        %579 = vmatpush.msra.mxu0 %v578
        %v580 = vand.u32 %v458, 4294901760
        %v581 = vsub.f32 %v458, %v580
        %v582 = vand.u32 %v581, 4294901760
        %583 = vmatmul.f32.gmra.mxu0 %v582
        %v584 = vpop.f32.mrf.mxu0
        %v585 = vadd.f32 %v556, %v584
        %v586 = vand.u32 %v461, 4294901760
        %v587 = vsub.f32 %v461, %v586
        %v588 = vand.u32 %v587, 4294901760
        %589 = vmatmul.f32.gmra.mxu0 %v588
        %v590 = vpop.f32.mrf.mxu0
        %v591 = vadd.f32 %v561, %v590
        %592 = vdwg.mxu0
        %593 = vmatpush.msra.mxu0 0.0
        %594 = vmatpush.msra.mxu0 0.0
        %595 = vmatpush.msra.mxu0 0.0
        %596 = vmatpush.msra.mxu0 0.0
        %597 = vmatpush.msra.mxu0 0.0
        %598 = vmatpush.msra.mxu0 0.0
        %599 = vmatpush.msra.mxu0 0.0
        %600 = vmatpush.msra.mxu0 0.0
        %601 = vmatpush.msra.mxu0 0.0
        %602 = vmatpush.msra.mxu0 0.0
        %603 = vmatpush.msra.mxu0 0.0
        %604 = vmatpush.msra.mxu0 0.0
        %605 = vmatpush.msra.mxu0 0.0
        %606 = vmatpush.msra.mxu0 0.0
        %607 = vmatpush.msra.mxu0 0.0
        %v608 = vand.u32 %v465, 4294901760
        %v609 = vsub.f32 %v465, %v608
        %v610 = vand.u32 %v609, 4294901760
        %611 = vmatpush.msra.mxu0 %v610
        %v612 = vand.u32 %v458, 4294901760
        %613 = vmatmul.f32.gmra.mxu0 %v612
        %v614 = vpop.f32.mrf.mxu0
        %v615 = vadd.f32 %v585, %v614
        %v616 = vand.u32 %v461, 4294901760
        %617 = vmatmul.f32.gmra.mxu0 %v616
        %v618 = vpop.f32.mrf.mxu0
        %v619 = vadd.f32 %v591, %v618
        %620 = vdwg.mxu0
        %621 = vmatpush.msra.mxu0 0.0
        %622 = vmatpush.msra.mxu0 0.0
        %623 = vmatpush.msra.mxu0 0.0
        %624 = vmatpush.msra.mxu0 0.0
        %625 = vmatpush.msra.mxu0 0.0
        %626 = vmatpush.msra.mxu0 0.0
        %627 = vmatpush.msra.mxu0 0.0
        %628 = vmatpush.msra.mxu0 0.0
        %629 = vmatpush.msra.mxu0 0.0
        %630 = vmatpush.msra.mxu0 0.0
        %631 = vmatpush.msra.mxu0 0.0
        %632 = vmatpush.msra.mxu0 0.0
        %633 = vmatpush.msra.mxu0 0.0
        %634 = vmatpush.msra.mxu0 0.0
        %635 = vmatpush.msra.mxu0 0.0
        %v636 = vand.u32 %v465, 4294901760
        %637 = vmatpush.msra.mxu0 %v636
        %v638 = vand.u32 %v458, 4294901760
        %639 = vmatmul.f32.gmra.mxu0 %v638
        %v640 = vpop.f32.mrf.mxu0
        %v641 = vadd.f32 %v615, %v640
        %v642 = vand.u32 %v461, 4294901760
        %643 = vmatmul.f32.gmra.mxu0 %v642
        %v644 = vpop.f32.mrf.mxu0
        %v645 = vadd.f32 %v619, %v644
        %646 = vdwg.mxu0
        %647 = vmatpush.msra.mxu0 0.0
        %648 = vmatpush.msra.mxu0 0.0
        %649 = vmatpush.msra.mxu0 0.0
        %650 = vmatpush.msra.mxu0 0.0
        %651 = vmatpush.msra.mxu0 0.0
        %652 = vmatpush.msra.mxu0 0.0
        %653 = vmatpush.msra.mxu0 0.0
        %654 = vmatpush.msra.mxu0 0.0
        %655 = vmatpush.msra.mxu0 0.0
        %656 = vmatpush.msra.mxu0 0.0
        %657 = vmatpush.msra.mxu0 0.0
        %658 = vmatpush.msra.mxu0 0.0
        %659 = vmatpush.msra.mxu0 0.0
        %660 = vmatpush.msra.mxu0 0.0
        %661 = vmatpush.msra.mxu0 0.0
        %v662 = vand.u32 %v468, 4294901760
        %663 = vmatpush.msra.mxu0 %v662
        %v664 = vand.u32 %v458, 4294901760
        %v665 = vsub.f32 %v458, %v664
        %v666 = vand.u32 %v665, 4294901760
        %v667 = vsub.f32 %v665, %v666
        %v668 = vand.u32 %v667, 4294901760
        %669 = vmatmul.f32.gmra.mxu0 %v668
        %v670 = vpop.f32.mrf.mxu0
        %v671 = vadd.f32 %v449, %v670
        %v672 = vand.u32 %v461, 4294901760
        %v673 = vsub.f32 %v461, %v672
        %v674 = vand.u32 %v673, 4294901760
        %v675 = vsub.f32 %v673, %v674
        %v676 = vand.u32 %v675, 4294901760
        %677 = vmatmul.f32.gmra.mxu0 %v676
        %v678 = vpop.f32.mrf.mxu0
        %v679 = vadd.f32 %v454, %v678
        %680 = vdwg.mxu0
        %681 = vmatpush.msra.mxu0 0.0
        %682 = vmatpush.msra.mxu0 0.0
        %683 = vmatpush.msra.mxu0 0.0
        %684 = vmatpush.msra.mxu0 0.0
        %685 = vmatpush.msra.mxu0 0.0
        %686 = vmatpush.msra.mxu0 0.0
        %687 = vmatpush.msra.mxu0 0.0
        %688 = vmatpush.msra.mxu0 0.0
        %689 = vmatpush.msra.mxu0 0.0
        %690 = vmatpush.msra.mxu0 0.0
        %691 = vmatpush.msra.mxu0 0.0
        %692 = vmatpush.msra.mxu0 0.0
        %693 = vmatpush.msra.mxu0 0.0
        %694 = vmatpush.msra.mxu0 0.0
        %695 = vmatpush.msra.mxu0 0.0
        %v696 = vand.u32 %v468, 4294901760
        %v697 = vsub.f32 %v468, %v696
        %v698 = vand.u32 %v697, 4294901760
        %v699 = vsub.f32 %v697, %v698
        %v700 = vand.u32 %v699, 4294901760
        %701 = vmatpush.msra.mxu0 %v700
        %v702 = vand.u32 %v458, 4294901760
        %703 = vmatmul.f32.gmra.mxu0 %v702
        %v704 = vpop.f32.mrf.mxu0
        %v705 = vadd.f32 %v671, %v704
        %v706 = vand.u32 %v461, 4294901760
        %707 = vmatmul.f32.gmra.mxu0 %v706
        %v708 = vpop.f32.mrf.mxu0
        %v709 = vadd.f32 %v679, %v708
        %710 = vdwg.mxu0
        %711 = vmatpush.msra.mxu0 0.0
        %712 = vmatpush.msra.mxu0 0.0
        %713 = vmatpush.msra.mxu0 0.0
        %714 = vmatpush.msra.mxu0 0.0
        %715 = vmatpush.msra.mxu0 0.0
        %716 = vmatpush.msra.mxu0 0.0
        %717 = vmatpush.msra.mxu0 0.0
        %718 = vmatpush.msra.mxu0 0.0
        %719 = vmatpush.msra.mxu0 0.0
        %720 = vmatpush.msra.mxu0 0.0
        %721 = vmatpush.msra.mxu0 0.0
        %722 = vmatpush.msra.mxu0 0.0
        %723 = vmatpush.msra.mxu0 0.0
        %724 = vmatpush.msra.mxu0 0.0
        %725 = vmatpush.msra.mxu0 0.0
        %v726 = vand.u32 %v468, 4294901760
        %v727 = vsub.f32 %v468, %v726
        %728 = vmatpush.msra.mxu0 %v727
        %v729 = vand.u32 %v458, 4294901760
        %v730 = vsub.f32 %v458, %v729
        %731 = vmatmul.f32.gmra.mxu0 %v730
        %v732 = vpop.f32.mrf.mxu0
        %v733 = vadd.f32 %v705, %v732
        %v734 = vand.u32 %v461, 4294901760
        %v735 = vsub.f32 %v461, %v734
        %736 = vmatmul.f32.gmra.mxu0 %v735
        %v737 = vpop.f32.mrf.mxu0
        %v738 = vadd.f32 %v709, %v737
        %739 = vdwg.mxu0
        %740 = vmatpush.msra.mxu0 0.0
        %741 = vmatpush.msra.mxu0 0.0
        %742 = vmatpush.msra.mxu0 0.0
        %743 = vmatpush.msra.mxu0 0.0
        %744 = vmatpush.msra.mxu0 0.0
        %745 = vmatpush.msra.mxu0 0.0
        %746 = vmatpush.msra.mxu0 0.0
        %747 = vmatpush.msra.mxu0 0.0
        %748 = vmatpush.msra.mxu0 0.0
        %749 = vmatpush.msra.mxu0 0.0
        %750 = vmatpush.msra.mxu0 0.0
        %751 = vmatpush.msra.mxu0 0.0
        %752 = vmatpush.msra.mxu0 0.0
        %753 = vmatpush.msra.mxu0 0.0
        %754 = vmatpush.msra.mxu0 0.0
        %v755 = vand.u32 %v468, 4294901760
        %756 = vmatpush.msra.mxu0 %v755
        %v757 = vand.u32 %v458, 4294901760
        %v758 = vsub.f32 %v458, %v757
        %v759 = vand.u32 %v758, 4294901760
        %760 = vmatmul.f32.gmra.mxu0 %v759
        %v761 = vpop.f32.mrf.mxu0
        %v762 = vadd.f32 %v733, %v761
        %v763 = vand.u32 %v461, 4294901760
        %v764 = vsub.f32 %v461, %v763
        %v765 = vand.u32 %v764, 4294901760
        %766 = vmatmul.f32.gmra.mxu0 %v765
        %v767 = vpop.f32.mrf.mxu0
        %v768 = vadd.f32 %v738, %v767
        %769 = vdwg.mxu0
        %770 = vmatpush.msra.mxu0 0.0
        %771 = vmatpush.msra.mxu0 0.0
        %772 = vmatpush.msra.mxu0 0.0
        %773 = vmatpush.msra.mxu0 0.0
        %774 = vmatpush.msra.mxu0 0.0
        %775 = vmatpush.msra.mxu0 0.0
        %776 = vmatpush.msra.mxu0 0.0
        %777 = vmatpush.msra.mxu0 0.0
        %778 = vmatpush.msra.mxu0 0.0
        %779 = vmatpush.msra.mxu0 0.0
        %780 = vmatpush.msra.mxu0 0.0
        %781 = vmatpush.msra.mxu0 0.0
        %782 = vmatpush.msra.mxu0 0.0
        %783 = vmatpush.msra.mxu0 0.0
        %784 = vmatpush.msra.mxu0 0.0
        %v785 = vand.u32 %v468, 4294901760
        %v786 = vsub.f32 %v468, %v785
        %v787 = vand.u32 %v786, 4294901760
        %788 = vmatpush.msra.mxu0 %v787
        %v789 = vand.u32 %v458, 4294901760
        %790 = vmatmul.f32.gmra.mxu0 %v789
        %v791 = vpop.f32.mrf.mxu0
        %v792 = vadd.f32 %v762, %v791
        %v793 = vand.u32 %v461, 4294901760
        %794 = vmatmul.f32.gmra.mxu0 %v793
        %v795 = vpop.f32.mrf.mxu0
        %v796 = vadd.f32 %v768, %v795
        %797 = vdwg.mxu0
        %798 = vmatpush.msra.mxu0 0.0
        %799 = vmatpush.msra.mxu0 0.0
        %800 = vmatpush.msra.mxu0 0.0
        %801 = vmatpush.msra.mxu0 0.0
        %802 = vmatpush.msra.mxu0 0.0
        %803 = vmatpush.msra.mxu0 0.0
        %804 = vmatpush.msra.mxu0 0.0
        %805 = vmatpush.msra.mxu0 0.0
        %806 = vmatpush.msra.mxu0 0.0
        %807 = vmatpush.msra.mxu0 0.0
        %808 = vmatpush.msra.mxu0 0.0
        %809 = vmatpush.msra.mxu0 0.0
        %810 = vmatpush.msra.mxu0 0.0
        %811 = vmatpush.msra.mxu0 0.0
        %812 = vmatpush.msra.mxu0 0.0
        %v813 = vand.u32 %v468, 4294901760
        %814 = vmatpush.msra.mxu0 %v813
        %v815 = vand.u32 %v458, 4294901760
        %816 = vmatmul.f32.gmra.mxu0 %v815
        %v817 = vpop.f32.mrf.mxu0
        %v818 = vadd.f32 %v792, %v817
        %v819 = vand.u32 %v461, 4294901760
        %820 = vmatmul.f32.gmra.mxu0 %v819
        %v821 = vpop.f32.mrf.mxu0
        %v822 = vadd.f32 %v796, %v821
        %823 = vdwg.mxu0
        %vm824 = vcmp.ge.f32.partialorder %v641, 0.0
        %vm825 = vcmp.ge.f32.partialorder %v818, 0.0
        %vm826 = vcmp.ge.f32.partialorder %v645, 0.0
        %vm827 = vcmp.ge.f32.partialorder %v822, 0.0
        %s828 = sld [smem:[#allocation2]]
        %v829 = vstv %s828
        %v830 = vmul.f32 %v829, %v641
        %v831 = vmul.f32 %v829, %v818
        %v832 = vmul.f32 %v829, %v645
        %v833 = vmul.f32 %v829, %v822
        %v834 = vsel %vm824, %v641, %v830
        %v835 = vsel %vm825, %v818, %v831
        %v836 = vsel %vm826, %v645, %v832
        %v837 = vsel %vm827, %v822, %v833
        %v838 = vld [vmem:[%s4] sm:$0xff]
        %v839 = vld [vmem:[%s4 + $0x8] sm:$0xff]
        %v840 = vld [vmem:[%s4 + $0x10] sm:$0xff]
        %v841 = vld [vmem:[%s4 + $0x18] sm:$0xff]
        %v842 = vld [vmem:[%s5] sm:$0xff]
        %v843 = vld [vmem:[%s5 + $0x8] sm:$0xff]
        %v844 = vld [vmem:[%s5 + $0x10] sm:$0xff]
        %v845 = vld [vmem:[%s5 + $0x18] sm:$0xff]
        %847 = vset.pattern.permute.xlu0 0
        %848 = vperm.xlu0 %847, %v842
        %v849 = vpop.permute.xlu0 %848
        %852 = vset.pattern.permute.xlu0 0
        %853 = vperm.xlu0 %852, %v843
        %v854 = vpop.permute.xlu0 %853
        %857 = vset.pattern.permute.xlu0 0
        %858 = vperm.xlu0 %857, %v844
        %v859 = vpop.permute.xlu0 %858
        %862 = vset.pattern.permute.xlu0 0
        %863 = vperm.xlu0 %862, %v845
        %v864 = vpop.permute.xlu0 %863
        %vm866 = vcmask 130048
        %v868 = vsel %vm866, %v838, 0
        %v871 = vsel %vm866, %v839, 0
        %v874 = vsel %vm866, %v840, 0
        %v877 = vsel %vm866, %v841, 0
        %879 = vmatpush.msra.mxu0 0.0
        %880 = vmatpush.msra.mxu0 0.0
        %881 = vmatpush.msra.mxu0 0.0
        %882 = vmatpush.msra.mxu0 0.0
        %883 = vmatpush.msra.mxu0 0.0
        %884 = vmatpush.msra.mxu0 0.0
        %885 = vmatpush.msra.mxu0 0.0
        %886 = vmatpush.msra.mxu0 0.0
        %887 = vmatpush.msra.mxu0 0.0
        %888 = vmatpush.msra.mxu0 0.0
        %889 = vmatpush.msra.mxu0 0.0
        %890 = vmatpush.msra.mxu0 0.0
        %891 = vmatpush.msra.mxu0 0.0
        %892 = vmatpush.msra.mxu0 0.0
        %v893 = vand.u32 %v836, 4294901760
        %894 = vmatpush.msra.mxu0 %v893
        %v895 = vand.u32 %v834, 4294901760
        %896 = vmatpush.msra.mxu0 %v895
        %v897 = vand.u32 %v868, 4294901760
        %v898 = vsub.f32 %v868, %v897
        %v899 = vand.u32 %v898, 4294901760
        %v900 = vsub.f32 %v898, %v899
        %v901 = vand.u32 %v900, 4294901760
        %902 = vmatmul.f32.gmra.mxu0 %v901
        %v903 = vpop.f32.mrf.mxu0
        %v904 = vadd.f32 %v849, %v903
        %v905 = vand.u32 %v871, 4294901760
        %v906 = vsub.f32 %v871, %v905
        %v907 = vand.u32 %v906, 4294901760
        %v908 = vsub.f32 %v906, %v907
        %v909 = vand.u32 %v908, 4294901760
        %910 = vmatmul.f32.gmra.mxu0 %v909
        %v911 = vpop.f32.mrf.mxu0
        %v912 = vadd.f32 %v854, %v911
        %v913 = vand.u32 %v874, 4294901760
        %v914 = vsub.f32 %v874, %v913
        %v915 = vand.u32 %v914, 4294901760
        %v916 = vsub.f32 %v914, %v915
        %v917 = vand.u32 %v916, 4294901760
        %918 = vmatmul.f32.gmra.mxu0 %v917
        %v919 = vpop.f32.mrf.mxu0
        %v920 = vadd.f32 %v859, %v919
        %v921 = vand.u32 %v877, 4294901760
        %v922 = vsub.f32 %v877, %v921
        %v923 = vand.u32 %v922, 4294901760
        %v924 = vsub.f32 %v922, %v923
        %v925 = vand.u32 %v924, 4294901760
        %926 = vmatmul.f32.gmra.mxu0 %v925
        %v927 = vpop.f32.mrf.mxu0
        %v928 = vadd.f32 %v864, %v927
        %929 = vdwg.mxu0
        %930 = vmatpush.msra.mxu0 0.0
        %931 = vmatpush.msra.mxu0 0.0
        %932 = vmatpush.msra.mxu0 0.0
        %933 = vmatpush.msra.mxu0 0.0
        %934 = vmatpush.msra.mxu0 0.0
        %935 = vmatpush.msra.mxu0 0.0
        %936 = vmatpush.msra.mxu0 0.0
        %937 = vmatpush.msra.mxu0 0.0
        %938 = vmatpush.msra.mxu0 0.0
        %939 = vmatpush.msra.mxu0 0.0
        %940 = vmatpush.msra.mxu0 0.0
        %941 = vmatpush.msra.mxu0 0.0
        %942 = vmatpush.msra.mxu0 0.0
        %943 = vmatpush.msra.mxu0 0.0
        %v944 = vand.u32 %v836, 4294901760
        %v945 = vsub.f32 %v836, %v944
        %v946 = vand.u32 %v945, 4294901760
        %v947 = vsub.f32 %v945, %v946
        %v948 = vand.u32 %v947, 4294901760
        %949 = vmatpush.msra.mxu0 %v948
        %v950 = vand.u32 %v834, 4294901760
        %v951 = vsub.f32 %v834, %v950
        %v952 = vand.u32 %v951, 4294901760
        %v953 = vsub.f32 %v951, %v952
        %v954 = vand.u32 %v953, 4294901760
        %955 = vmatpush.msra.mxu0 %v954
        %v956 = vand.u32 %v868, 4294901760
        %957 = vmatmul.f32.gmra.mxu0 %v956
        %v958 = vpop.f32.mrf.mxu0
        %v959 = vadd.f32 %v904, %v958
        %v960 = vand.u32 %v871, 4294901760
        %961 = vmatmul.f32.gmra.mxu0 %v960
        %v962 = vpop.f32.mrf.mxu0
        %v963 = vadd.f32 %v912, %v962
        %v964 = vand.u32 %v874, 4294901760
        %965 = vmatmul.f32.gmra.mxu0 %v964
        %v966 = vpop.f32.mrf.mxu0
        %v967 = vadd.f32 %v920, %v966
        %v968 = vand.u32 %v877, 4294901760
        %969 = vmatmul.f32.gmra.mxu0 %v968
        %v970 = vpop.f32.mrf.mxu0
        %v971 = vadd.f32 %v928, %v970
        %972 = vdwg.mxu0
        %973 = vmatpush.msra.mxu0 0.0
        %974 = vmatpush.msra.mxu0 0.0
        %975 = vmatpush.msra.mxu0 0.0
        %976 = vmatpush.msra.mxu0 0.0
        %977 = vmatpush.msra.mxu0 0.0
        %978 = vmatpush.msra.mxu0 0.0
        %979 = vmatpush.msra.mxu0 0.0
        %980 = vmatpush.msra.mxu0 0.0
        %981 = vmatpush.msra.mxu0 0.0
        %982 = vmatpush.msra.mxu0 0.0
        %983 = vmatpush.msra.mxu0 0.0
        %984 = vmatpush.msra.mxu0 0.0
        %985 = vmatpush.msra.mxu0 0.0
        %986 = vmatpush.msra.mxu0 0.0
        %v987 = vand.u32 %v836, 4294901760
        %v988 = vsub.f32 %v836, %v987
        %989 = vmatpush.msra.mxu0 %v988
        %v990 = vand.u32 %v834, 4294901760
        %v991 = vsub.f32 %v834, %v990
        %992 = vmatpush.msra.mxu0 %v991
        %v993 = vand.u32 %v868, 4294901760
        %v994 = vsub.f32 %v868, %v993
        %995 = vmatmul.f32.gmra.mxu0 %v994
        %v996 = vpop.f32.mrf.mxu0
        %v997 = vadd.f32 %v959, %v996
        %v998 = vand.u32 %v871, 4294901760
        %v999 = vsub.f32 %v871, %v998
        %1000 = vmatmul.f32.gmra.mxu0 %v999
        %v1001 = vpop.f32.mrf.mxu0
        %v1002 = vadd.f32 %v963, %v1001
        %v1003 = vand.u32 %v874, 4294901760
        %v1004 = vsub.f32 %v874, %v1003
        %1005 = vmatmul.f32.gmra.mxu0 %v1004
        %v1006 = vpop.f32.mrf.mxu0
        %v1007 = vadd.f32 %v967, %v1006
        %v1008 = vand.u32 %v877, 4294901760
        %v1009 = vsub.f32 %v877, %v1008
        %1010 = vmatmul.f32.gmra.mxu0 %v1009
        %v1011 = vpop.f32.mrf.mxu0
        %v1012 = vadd.f32 %v971, %v1011
        %1013 = vdwg.mxu0
        %1014 = vmatpush.msra.mxu0 0.0
        %1015 = vmatpush.msra.mxu0 0.0
        %1016 = vmatpush.msra.mxu0 0.0
        %1017 = vmatpush.msra.mxu0 0.0
        %1018 = vmatpush.msra.mxu0 0.0
        %1019 = vmatpush.msra.mxu0 0.0
        %1020 = vmatpush.msra.mxu0 0.0
        %1021 = vmatpush.msra.mxu0 0.0
        %1022 = vmatpush.msra.mxu0 0.0
        %1023 = vmatpush.msra.mxu0 0.0
        %1024 = vmatpush.msra.mxu0 0.0
        %1025 = vmatpush.msra.mxu0 0.0
        %1026 = vmatpush.msra.mxu0 0.0
        %1027 = vmatpush.msra.mxu0 0.0
        %v1028 = vand.u32 %v836, 4294901760
        %1029 = vmatpush.msra.mxu0 %v1028
        %v1030 = vand.u32 %v834, 4294901760
        %1031 = vmatpush.msra.mxu0 %v1030
        %v1032 = vand.u32 %v868, 4294901760
        %v1033 = vsub.f32 %v868, %v1032
        %v1034 = vand.u32 %v1033, 4294901760
        %1035 = vmatmul.f32.gmra.mxu0 %v1034
        %v1036 = vpop.f32.mrf.mxu0
        %v1037 = vadd.f32 %v997, %v1036
        %v1038 = vand.u32 %v871, 4294901760
        %v1039 = vsub.f32 %v871, %v1038
        %v1040 = vand.u32 %v1039, 4294901760
        %1041 = vmatmul.f32.gmra.mxu0 %v1040
        %v1042 = vpop.f32.mrf.mxu0
        %v1043 = vadd.f32 %v1002, %v1042
        %v1044 = vand.u32 %v874, 4294901760
        %v1045 = vsub.f32 %v874, %v1044
        %v1046 = vand.u32 %v1045, 4294901760
        %1047 = vmatmul.f32.gmra.mxu0 %v1046
        %v1048 = vpop.f32.mrf.mxu0
        %v1049 = vadd.f32 %v1007, %v1048
        %v1050 = vand.u32 %v877, 4294901760
        %v1051 = vsub.f32 %v877, %v1050
        %v1052 = vand.u32 %v1051, 4294901760
        %1053 = vmatmul.f32.gmra.mxu0 %v1052
        %v1054 = vpop.f32.mrf.mxu0
        %v1055 = vadd.f32 %v1012, %v1054
        %1056 = vdwg.mxu0
        %1057 = vmatpush.msra.mxu0 0.0
        %1058 = vmatpush.msra.mxu0 0.0
        %1059 = vmatpush.msra.mxu0 0.0
        %1060 = vmatpush.msra.mxu0 0.0
        %1061 = vmatpush.msra.mxu0 0.0
        %1062 = vmatpush.msra.mxu0 0.0
        %1063 = vmatpush.msra.mxu0 0.0
        %1064 = vmatpush.msra.mxu0 0.0
        %1065 = vmatpush.msra.mxu0 0.0
        %1066 = vmatpush.msra.mxu0 0.0
        %1067 = vmatpush.msra.mxu0 0.0
        %1068 = vmatpush.msra.mxu0 0.0
        %1069 = vmatpush.msra.mxu0 0.0
        %1070 = vmatpush.msra.mxu0 0.0
        %v1071 = vand.u32 %v836, 4294901760
        %v1072 = vsub.f32 %v836, %v1071
        %v1073 = vand.u32 %v1072, 4294901760
        %1074 = vmatpush.msra.mxu0 %v1073
        %v1075 = vand.u32 %v834, 4294901760
        %v1076 = vsub.f32 %v834, %v1075
        %v1077 = vand.u32 %v1076, 4294901760
        %1078 = vmatpush.msra.mxu0 %v1077
        %v1079 = vand.u32 %v868, 4294901760
        %1080 = vmatmul.f32.gmra.mxu0 %v1079
        %v1081 = vpop.f32.mrf.mxu0
        %v1082 = vadd.f32 %v1037, %v1081
        %v1083 = vand.u32 %v871, 4294901760
        %1084 = vmatmul.f32.gmra.mxu0 %v1083
        %v1085 = vpop.f32.mrf.mxu0
        %v1086 = vadd.f32 %v1043, %v1085
        %v1087 = vand.u32 %v874, 4294901760
        %1088 = vmatmul.f32.gmra.mxu0 %v1087
        %v1089 = vpop.f32.mrf.mxu0
        %v1090 = vadd.f32 %v1049, %v1089
        %v1091 = vand.u32 %v877, 4294901760
        %1092 = vmatmul.f32.gmra.mxu0 %v1091
        %v1093 = vpop.f32.mrf.mxu0
        %v1094 = vadd.f32 %v1055, %v1093
        %1095 = vdwg.mxu0
        %1096 = vmatpush.msra.mxu0 0.0
        %1097 = vmatpush.msra.mxu0 0.0
        %1098 = vmatpush.msra.mxu0 0.0
        %1099 = vmatpush.msra.mxu0 0.0
        %1100 = vmatpush.msra.mxu0 0.0
        %1101 = vmatpush.msra.mxu0 0.0
        %1102 = vmatpush.msra.mxu0 0.0
        %1103 = vmatpush.msra.mxu0 0.0
        %1104 = vmatpush.msra.mxu0 0.0
        %1105 = vmatpush.msra.mxu0 0.0
        %1106 = vmatpush.msra.mxu0 0.0
        %1107 = vmatpush.msra.mxu0 0.0
        %1108 = vmatpush.msra.mxu0 0.0
        %1109 = vmatpush.msra.mxu0 0.0
        %v1110 = vand.u32 %v836, 4294901760
        %1111 = vmatpush.msra.mxu0 %v1110
        %v1112 = vand.u32 %v834, 4294901760
        %1113 = vmatpush.msra.mxu0 %v1112
        %v1114 = vand.u32 %v868, 4294901760
        %1115 = vmatmul.f32.gmra.mxu0 %v1114
        %v1116 = vpop.f32.mrf.mxu0
        %v1117 = vadd.f32 %v1082, %v1116
        %v1118 = vand.u32 %v871, 4294901760
        %1119 = vmatmul.f32.gmra.mxu0 %v1118
        %v1120 = vpop.f32.mrf.mxu0
        %v1121 = vadd.f32 %v1086, %v1120
        %v1122 = vand.u32 %v874, 4294901760
        %1123 = vmatmul.f32.gmra.mxu0 %v1122
        %v1124 = vpop.f32.mrf.mxu0
        %v1125 = vadd.f32 %v1090, %v1124
        %v1126 = vand.u32 %v877, 4294901760
        %1127 = vmatmul.f32.gmra.mxu0 %v1126
        %v1128 = vpop.f32.mrf.mxu0
        %v1129 = vadd.f32 %v1094, %v1128
        %1130 = vdwg.mxu0
        %1131 = vmatpush.msra.mxu0 0.0
        %1132 = vmatpush.msra.mxu0 0.0
        %1133 = vmatpush.msra.mxu0 0.0
        %1134 = vmatpush.msra.mxu0 0.0
        %1135 = vmatpush.msra.mxu0 0.0
        %1136 = vmatpush.msra.mxu0 0.0
        %1137 = vmatpush.msra.mxu0 0.0
        %1138 = vmatpush.msra.mxu0 0.0
        %1139 = vmatpush.msra.mxu0 0.0
        %1140 = vmatpush.msra.mxu0 0.0
        %1141 = vmatpush.msra.mxu0 0.0
        %1142 = vmatpush.msra.mxu0 0.0
        %1143 = vmatpush.msra.mxu0 0.0
        %1144 = vmatpush.msra.mxu0 0.0
        %v1145 = vand.u32 %v837, 4294901760
        %1146 = vmatpush.msra.mxu0 %v1145
        %v1147 = vand.u32 %v835, 4294901760
        %1148 = vmatpush.msra.mxu0 %v1147
        %v1149 = vand.u32 %v868, 4294901760
        %v1150 = vsub.f32 %v868, %v1149
        %v1151 = vand.u32 %v1150, 4294901760
        %v1152 = vsub.f32 %v1150, %v1151
        %v1153 = vand.u32 %v1152, 4294901760
        %1154 = vmatmul.f32.gmra.mxu0 %v1153
        %v1155 = vpop.f32.mrf.mxu0
        %v1156 = vadd.f32 %v849, %v1155
        %v1157 = vand.u32 %v871, 4294901760
        %v1158 = vsub.f32 %v871, %v1157
        %v1159 = vand.u32 %v1158, 4294901760
        %v1160 = vsub.f32 %v1158, %v1159
        %v1161 = vand.u32 %v1160, 4294901760
        %1162 = vmatmul.f32.gmra.mxu0 %v1161
        %v1163 = vpop.f32.mrf.mxu0
        %v1164 = vadd.f32 %v854, %v1163
        %v1165 = vand.u32 %v874, 4294901760
        %v1166 = vsub.f32 %v874, %v1165
        %v1167 = vand.u32 %v1166, 4294901760
        %v1168 = vsub.f32 %v1166, %v1167
        %v1169 = vand.u32 %v1168, 4294901760
        %1170 = vmatmul.f32.gmra.mxu0 %v1169
        %v1171 = vpop.f32.mrf.mxu0
        %v1172 = vadd.f32 %v859, %v1171
        %v1173 = vand.u32 %v877, 4294901760
        %v1174 = vsub.f32 %v877, %v1173
        %v1175 = vand.u32 %v1174, 4294901760
        %v1176 = vsub.f32 %v1174, %v1175
        %v1177 = vand.u32 %v1176, 4294901760
        %1178 = vmatmul.f32.gmra.mxu0 %v1177
        %v1179 = vpop.f32.mrf.mxu0
        %v1180 = vadd.f32 %v864, %v1179
        %1181 = vdwg.mxu0
        %1182 = vmatpush.msra.mxu0 0.0
        %1183 = vmatpush.msra.mxu0 0.0
        %1184 = vmatpush.msra.mxu0 0.0
        %1185 = vmatpush.msra.mxu0 0.0
        %1186 = vmatpush.msra.mxu0 0.0
        %1187 = vmatpush.msra.mxu0 0.0
        %1188 = vmatpush.msra.mxu0 0.0
        %1189 = vmatpush.msra.mxu0 0.0
        %1190 = vmatpush.msra.mxu0 0.0
        %1191 = vmatpush.msra.mxu0 0.0
        %1192 = vmatpush.msra.mxu0 0.0
        %1193 = vmatpush.msra.mxu0 0.0
        %1194 = vmatpush.msra.mxu0 0.0
        %1195 = vmatpush.msra.mxu0 0.0
        %v1196 = vand.u32 %v837, 4294901760
        %v1197 = vsub.f32 %v837, %v1196
        %v1198 = vand.u32 %v1197, 4294901760
        %v1199 = vsub.f32 %v1197, %v1198
        %v1200 = vand.u32 %v1199, 4294901760
        %1201 = vmatpush.msra.mxu0 %v1200
        %v1202 = vand.u32 %v835, 4294901760
        %v1203 = vsub.f32 %v835, %v1202
        %v1204 = vand.u32 %v1203, 4294901760
        %v1205 = vsub.f32 %v1203, %v1204
        %v1206 = vand.u32 %v1205, 4294901760
        %1207 = vmatpush.msra.mxu0 %v1206
        %v1208 = vand.u32 %v868, 4294901760
        %1209 = vmatmul.f32.gmra.mxu0 %v1208
        %v1210 = vpop.f32.mrf.mxu0
        %v1211 = vadd.f32 %v1156, %v1210
        %v1212 = vand.u32 %v871, 4294901760
        %1213 = vmatmul.f32.gmra.mxu0 %v1212
        %v1214 = vpop.f32.mrf.mxu0
        %v1215 = vadd.f32 %v1164, %v1214
        %v1216 = vand.u32 %v874, 4294901760
        %1217 = vmatmul.f32.gmra.mxu0 %v1216
        %v1218 = vpop.f32.mrf.mxu0
        %v1219 = vadd.f32 %v1172, %v1218
        %v1220 = vand.u32 %v877, 4294901760
        %1221 = vmatmul.f32.gmra.mxu0 %v1220
        %v1222 = vpop.f32.mrf.mxu0
        %v1223 = vadd.f32 %v1180, %v1222
        %1224 = vdwg.mxu0
        %1225 = vmatpush.msra.mxu0 0.0
        %1226 = vmatpush.msra.mxu0 0.0
        %1227 = vmatpush.msra.mxu0 0.0
        %1228 = vmatpush.msra.mxu0 0.0
        %1229 = vmatpush.msra.mxu0 0.0
        %1230 = vmatpush.msra.mxu0 0.0
        %1231 = vmatpush.msra.mxu0 0.0
        %1232 = vmatpush.msra.mxu0 0.0
        %1233 = vmatpush.msra.mxu0 0.0
        %1234 = vmatpush.msra.mxu0 0.0
        %1235 = vmatpush.msra.mxu0 0.0
        %1236 = vmatpush.msra.mxu0 0.0
        %1237 = vmatpush.msra.mxu0 0.0
        %1238 = vmatpush.msra.mxu0 0.0
        %v1239 = vand.u32 %v837, 4294901760
        %v1240 = vsub.f32 %v837, %v1239
        %1241 = vmatpush.msra.mxu0 %v1240
        %v1242 = vand.u32 %v835, 4294901760
        %v1243 = vsub.f32 %v835, %v1242
        %1244 = vmatpush.msra.mxu0 %v1243
        %v1245 = vand.u32 %v868, 4294901760
        %v1246 = vsub.f32 %v868, %v1245
        %1247 = vmatmul.f32.gmra.mxu0 %v1246
        %v1248 = vpop.f32.mrf.mxu0
        %v1249 = vadd.f32 %v1211, %v1248
        %v1250 = vand.u32 %v871, 4294901760
        %v1251 = vsub.f32 %v871, %v1250
        %1252 = vmatmul.f32.gmra.mxu0 %v1251
        %v1253 = vpop.f32.mrf.mxu0
        %v1254 = vadd.f32 %v1215, %v1253
        %v1255 = vand.u32 %v874, 4294901760
        %v1256 = vsub.f32 %v874, %v1255
        %1257 = vmatmul.f32.gmra.mxu0 %v1256
        %v1258 = vpop.f32.mrf.mxu0
        %v1259 = vadd.f32 %v1219, %v1258
        %v1260 = vand.u32 %v877, 4294901760
        %v1261 = vsub.f32 %v877, %v1260
        %1262 = vmatmul.f32.gmra.mxu0 %v1261
        %v1263 = vpop.f32.mrf.mxu0
        %v1264 = vadd.f32 %v1223, %v1263
        %1265 = vdwg.mxu0
        %1266 = vmatpush.msra.mxu0 0.0
        %1267 = vmatpush.msra.mxu0 0.0
        %1268 = vmatpush.msra.mxu0 0.0
        %1269 = vmatpush.msra.mxu0 0.0
        %1270 = vmatpush.msra.mxu0 0.0
        %1271 = vmatpush.msra.mxu0 0.0
        %1272 = vmatpush.msra.mxu0 0.0
        %1273 = vmatpush.msra.mxu0 0.0
        %1274 = vmatpush.msra.mxu0 0.0
        %1275 = vmatpush.msra.mxu0 0.0
        %1276 = vmatpush.msra.mxu0 0.0
        %1277 = vmatpush.msra.mxu0 0.0
        %1278 = vmatpush.msra.mxu0 0.0
        %1279 = vmatpush.msra.mxu0 0.0
        %v1280 = vand.u32 %v837, 4294901760
        %1281 = vmatpush.msra.mxu0 %v1280
        %v1282 = vand.u32 %v835, 4294901760
        %1283 = vmatpush.msra.mxu0 %v1282
        %v1284 = vand.u32 %v868, 4294901760
        %v1285 = vsub.f32 %v868, %v1284
        %v1286 = vand.u32 %v1285, 4294901760
        %1287 = vmatmul.f32.gmra.mxu0 %v1286
        %v1288 = vpop.f32.mrf.mxu0
        %v1289 = vadd.f32 %v1249, %v1288
        %v1290 = vand.u32 %v871, 4294901760
        %v1291 = vsub.f32 %v871, %v1290
        %v1292 = vand.u32 %v1291, 4294901760
        %1293 = vmatmul.f32.gmra.mxu0 %v1292
        %v1294 = vpop.f32.mrf.mxu0
        %v1295 = vadd.f32 %v1254, %v1294
        %v1296 = vand.u32 %v874, 4294901760
        %v1297 = vsub.f32 %v874, %v1296
        %v1298 = vand.u32 %v1297, 4294901760
        %1299 = vmatmul.f32.gmra.mxu0 %v1298
        %v1300 = vpop.f32.mrf.mxu0
        %v1301 = vadd.f32 %v1259, %v1300
        %v1302 = vand.u32 %v877, 4294901760
        %v1303 = vsub.f32 %v877, %v1302
        %v1304 = vand.u32 %v1303, 4294901760
        %1305 = vmatmul.f32.gmra.mxu0 %v1304
        %v1306 = vpop.f32.mrf.mxu0
        %v1307 = vadd.f32 %v1264, %v1306
        %1308 = vdwg.mxu0
        %1309 = vmatpush.msra.mxu0 0.0
        %1310 = vmatpush.msra.mxu0 0.0
        %1311 = vmatpush.msra.mxu0 0.0
        %1312 = vmatpush.msra.mxu0 0.0
        %1313 = vmatpush.msra.mxu0 0.0
        %1314 = vmatpush.msra.mxu0 0.0
        %1315 = vmatpush.msra.mxu0 0.0
        %1316 = vmatpush.msra.mxu0 0.0
        %1317 = vmatpush.msra.mxu0 0.0
        %1318 = vmatpush.msra.mxu0 0.0
        %1319 = vmatpush.msra.mxu0 0.0
        %1320 = vmatpush.msra.mxu0 0.0
        %1321 = vmatpush.msra.mxu0 0.0
        %1322 = vmatpush.msra.mxu0 0.0
        %v1323 = vand.u32 %v837, 4294901760
        %v1324 = vsub.f32 %v837, %v1323
        %v1325 = vand.u32 %v1324, 4294901760
        %1326 = vmatpush.msra.mxu0 %v1325
        %v1327 = vand.u32 %v835, 4294901760
        %v1328 = vsub.f32 %v835, %v1327
        %v1329 = vand.u32 %v1328, 4294901760
        %1330 = vmatpush.msra.mxu0 %v1329
        %v1331 = vand.u32 %v868, 4294901760
        %1332 = vmatmul.f32.gmra.mxu0 %v1331
        %v1333 = vpop.f32.mrf.mxu0
        %v1334 = vadd.f32 %v1289, %v1333
        %v1335 = vand.u32 %v871, 4294901760
        %1336 = vmatmul.f32.gmra.mxu0 %v1335
        %v1337 = vpop.f32.mrf.mxu0
        %v1338 = vadd.f32 %v1295, %v1337
        %v1339 = vand.u32 %v874, 4294901760
        %1340 = vmatmul.f32.gmra.mxu0 %v1339
        %v1341 = vpop.f32.mrf.mxu0
        %v1342 = vadd.f32 %v1301, %v1341
        %v1343 = vand.u32 %v877, 4294901760
        %1344 = vmatmul.f32.gmra.mxu0 %v1343
        %v1345 = vpop.f32.mrf.mxu0
        %v1346 = vadd.f32 %v1307, %v1345
        %1347 = vdwg.mxu0
        %1348 = vmatpush.msra.mxu0 0.0
        %1349 = vmatpush.msra.mxu0 0.0
        %1350 = vmatpush.msra.mxu0 0.0
        %1351 = vmatpush.msra.mxu0 0.0
        %1352 = vmatpush.msra.mxu0 0.0
        %1353 = vmatpush.msra.mxu0 0.0
        %1354 = vmatpush.msra.mxu0 0.0
        %1355 = vmatpush.msra.mxu0 0.0
        %1356 = vmatpush.msra.mxu0 0.0
        %1357 = vmatpush.msra.mxu0 0.0
        %1358 = vmatpush.msra.mxu0 0.0
        %1359 = vmatpush.msra.mxu0 0.0
        %1360 = vmatpush.msra.mxu0 0.0
        %1361 = vmatpush.msra.mxu0 0.0
        %v1362 = vand.u32 %v837, 4294901760
        %1363 = vmatpush.msra.mxu0 %v1362
        %v1364 = vand.u32 %v835, 4294901760
        %1365 = vmatpush.msra.mxu0 %v1364
        %v1366 = vand.u32 %v868, 4294901760
        %1367 = vmatmul.f32.gmra.mxu0 %v1366
        %v1368 = vpop.f32.mrf.mxu0
        %v1369 = vadd.f32 %v1334, %v1368
        %v1370 = vand.u32 %v871, 4294901760
        %1371 = vmatmul.f32.gmra.mxu0 %v1370
        %v1372 = vpop.f32.mrf.mxu0
        %v1373 = vadd.f32 %v1338, %v1372
        %v1374 = vand.u32 %v874, 4294901760
        %1375 = vmatmul.f32.gmra.mxu0 %v1374
        %v1376 = vpop.f32.mrf.mxu0
        %v1377 = vadd.f32 %v1342, %v1376
        %v1378 = vand.u32 %v877, 4294901760
        %1379 = vmatmul.f32.gmra.mxu0 %v1378
        %v1380 = vpop.f32.mrf.mxu0
        %v1381 = vadd.f32 %v1346, %v1380
        %1382 = vdwg.mxu0
        %vm1383 = vcmp.ge.f32.partialorder %v1117, 0.0
        %vm1384 = vcmp.ge.f32.partialorder %v1369, 0.0
        %vm1385 = vcmp.ge.f32.partialorder %v1121, 0.0
        %vm1386 = vcmp.ge.f32.partialorder %v1373, 0.0
        %vm1387 = vcmp.ge.f32.partialorder %v1125, 0.0
        %vm1388 = vcmp.ge.f32.partialorder %v1377, 0.0
        %vm1389 = vcmp.ge.f32.partialorder %v1129, 0.0
        %vm1390 = vcmp.ge.f32.partialorder %v1381, 0.0
        %s1391 = sld [smem:[#allocation2 + $0x1]]
        %v1392 = vstv %s1391
        %v1393 = vmul.f32 %v1392, %v1117
        %v1394 = vmul.f32 %v1392, %v1369
        %v1395 = vmul.f32 %v1392, %v1121
        %v1396 = vmul.f32 %v1392, %v1373
        %v1397 = vmul.f32 %v1392, %v1125
        %v1398 = vmul.f32 %v1392, %v1377
        %v1399 = vmul.f32 %v1392, %v1129
        %v1400 = vmul.f32 %v1392, %v1381
        %v1401 = vsel %vm1383, %v1117, %v1393
        %v1402 = vsel %vm1384, %v1369, %v1394
        %v1403 = vsel %vm1385, %v1121, %v1395
        %v1404 = vsel %vm1386, %v1373, %v1396
        %v1405 = vsel %vm1387, %v1125, %v1397
        %v1406 = vsel %vm1388, %v1377, %v1398
        %v1407 = vsel %vm1389, %v1129, %v1399
        %v1408 = vsel %vm1390, %v1381, %v1400
        %v1409 = vld [vmem:[%s6] sm:$0xff]
        %v1410 = vld [vmem:[%s6 + $0x8] sm:$0xff]
        %v1411 = vld [vmem:[%s6 + $0x10] sm:$0xff]
        %v1412 = vld [vmem:[%s6 + $0x18] sm:$0xff]
        %v1413 = vld [vmem:[%s7] sm:$0xff]
        %v1414 = vld [vmem:[%s7 + $0x8] sm:$0xff]
        %v1415 = vld [vmem:[%s7 + $0x10] sm:$0xff]
        %v1416 = vld [vmem:[%s7 + $0x18] sm:$0xff]
        %v1418 = vsel %vm866, %v1413, 0
        %v1421 = vsel %vm866, %v1414, 0
        %v1424 = vsel %vm866, %v1415, 0
        %v1427 = vsel %vm866, %v1416, 0
        %1429 = vmatpush.msra.mxu0 0.0
        %1430 = vmatpush.msra.mxu0 0.0
        %1431 = vmatpush.msra.mxu0 0.0
        %1432 = vmatpush.msra.mxu0 0.0
        %1433 = vmatpush.msra.mxu0 0.0
        %1434 = vmatpush.msra.mxu0 0.0
        %1435 = vmatpush.msra.mxu0 0.0
        %1436 = vmatpush.msra.mxu0 0.0
        %1437 = vmatpush.msra.mxu0 0.0
        %1438 = vmatpush.msra.mxu0 0.0
        %1439 = vmatpush.msra.mxu0 0.0
        %1440 = vmatpush.msra.mxu0 0.0
        %1441 = vmatpush.msra.mxu0 0.0
        %1442 = vmatpush.msra.mxu0 0.0
        %v1443 = vand.u32 %v645, 4294901760
        %1444 = vmatpush.msra.mxu0 %v1443
        %v1445 = vand.u32 %v641, 4294901760
        %1446 = vmatpush.msra.mxu0 %v1445
        %v1447 = vand.u32 %v1418, 4294901760
        %v1448 = vsub.f32 %v1418, %v1447
        %v1449 = vand.u32 %v1448, 4294901760
        %v1450 = vsub.f32 %v1448, %v1449
        %v1451 = vand.u32 %v1450, 4294901760
        %1452 = vmatmul.f32.gmra.mxu0 %v1451
        %v1453 = vpop.f32.mrf.mxu0
        %v1454 = vadd.f32 0.0, %v1453
        %v1455 = vand.u32 %v1421, 4294901760
        %v1456 = vsub.f32 %v1421, %v1455
        %v1457 = vand.u32 %v1456, 4294901760
        %v1458 = vsub.f32 %v1456, %v1457
        %v1459 = vand.u32 %v1458, 4294901760
        %1460 = vmatmul.f32.gmra.mxu0 %v1459
        %v1461 = vpop.f32.mrf.mxu0
        %v1462 = vadd.f32 0.0, %v1461
        %v1463 = vand.u32 %v1424, 4294901760
        %v1464 = vsub.f32 %v1424, %v1463
        %v1465 = vand.u32 %v1464, 4294901760
        %v1466 = vsub.f32 %v1464, %v1465
        %v1467 = vand.u32 %v1466, 4294901760
        %1468 = vmatmul.f32.gmra.mxu0 %v1467
        %v1469 = vpop.f32.mrf.mxu0
        %v1470 = vadd.f32 0.0, %v1469
        %v1471 = vand.u32 %v1427, 4294901760
        %v1472 = vsub.f32 %v1427, %v1471
        %v1473 = vand.u32 %v1472, 4294901760
        %v1474 = vsub.f32 %v1472, %v1473
        %v1475 = vand.u32 %v1474, 4294901760
        %1476 = vmatmul.f32.gmra.mxu0 %v1475
        %v1477 = vpop.f32.mrf.mxu0
        %v1478 = vadd.f32 0.0, %v1477
        %1479 = vdwg.mxu0
        %1480 = vmatpush.msra.mxu0 0.0
        %1481 = vmatpush.msra.mxu0 0.0
        %1482 = vmatpush.msra.mxu0 0.0
        %1483 = vmatpush.msra.mxu0 0.0
        %1484 = vmatpush.msra.mxu0 0.0
        %1485 = vmatpush.msra.mxu0 0.0
        %1486 = vmatpush.msra.mxu0 0.0
        %1487 = vmatpush.msra.mxu0 0.0
        %1488 = vmatpush.msra.mxu0 0.0
        %1489 = vmatpush.msra.mxu0 0.0
        %1490 = vmatpush.msra.mxu0 0.0
        %1491 = vmatpush.msra.mxu0 0.0
        %1492 = vmatpush.msra.mxu0 0.0
        %1493 = vmatpush.msra.mxu0 0.0
        %v1494 = vand.u32 %v645, 4294901760
        %v1495 = vsub.f32 %v645, %v1494
        %v1496 = vand.u32 %v1495, 4294901760
        %v1497 = vsub.f32 %v1495, %v1496
        %v1498 = vand.u32 %v1497, 4294901760
        %1499 = vmatpush.msra.mxu0 %v1498
        %v1500 = vand.u32 %v641, 4294901760
        %v1501 = vsub.f32 %v641, %v1500
        %v1502 = vand.u32 %v1501, 4294901760
        %v1503 = vsub.f32 %v1501, %v1502
        %v1504 = vand.u32 %v1503, 4294901760
        %1505 = vmatpush.msra.mxu0 %v1504
        %v1506 = vand.u32 %v1418, 4294901760
        %1507 = vmatmul.f32.gmra.mxu0 %v1506
        %v1508 = vpop.f32.mrf.mxu0
        %v1509 = vadd.f32 %v1454, %v1508
        %v1510 = vand.u32 %v1421, 4294901760
        %1511 = vmatmul.f32.gmra.mxu0 %v1510
        %v1512 = vpop.f32.mrf.mxu0
        %v1513 = vadd.f32 %v1462, %v1512
        %v1514 = vand.u32 %v1424, 4294901760
        %1515 = vmatmul.f32.gmra.mxu0 %v1514
        %v1516 = vpop.f32.mrf.mxu0
        %v1517 = vadd.f32 %v1470, %v1516
        %v1518 = vand.u32 %v1427, 4294901760
        %1519 = vmatmul.f32.gmra.mxu0 %v1518
        %v1520 = vpop.f32.mrf.mxu0
        %v1521 = vadd.f32 %v1478, %v1520
        %1522 = vdwg.mxu0
        %1523 = vmatpush.msra.mxu0 0.0
        %1524 = vmatpush.msra.mxu0 0.0
        %1525 = vmatpush.msra.mxu0 0.0
        %1526 = vmatpush.msra.mxu0 0.0
        %1527 = vmatpush.msra.mxu0 0.0
        %1528 = vmatpush.msra.mxu0 0.0
        %1529 = vmatpush.msra.mxu0 0.0
        %1530 = vmatpush.msra.mxu0 0.0
        %1531 = vmatpush.msra.mxu0 0.0
        %1532 = vmatpush.msra.mxu0 0.0
        %1533 = vmatpush.msra.mxu0 0.0
        %1534 = vmatpush.msra.mxu0 0.0
        %1535 = vmatpush.msra.mxu0 0.0
        %1536 = vmatpush.msra.mxu0 0.0
        %v1537 = vand.u32 %v645, 4294901760
        %v1538 = vsub.f32 %v645, %v1537
        %1539 = vmatpush.msra.mxu0 %v1538
        %v1540 = vand.u32 %v641, 4294901760
        %v1541 = vsub.f32 %v641, %v1540
        %1542 = vmatpush.msra.mxu0 %v1541
        %v1543 = vand.u32 %v1418, 4294901760
        %v1544 = vsub.f32 %v1418, %v1543
        %1545 = vmatmul.f32.gmra.mxu0 %v1544
        %v1546 = vpop.f32.mrf.mxu0
        %v1547 = vadd.f32 %v1509, %v1546
        %v1548 = vand.u32 %v1421, 4294901760
        %v1549 = vsub.f32 %v1421, %v1548
        %1550 = vmatmul.f32.gmra.mxu0 %v1549
        %v1551 = vpop.f32.mrf.mxu0
        %v1552 = vadd.f32 %v1513, %v1551
        %v1553 = vand.u32 %v1424, 4294901760
        %v1554 = vsub.f32 %v1424, %v1553
        %1555 = vmatmul.f32.gmra.mxu0 %v1554
        %v1556 = vpop.f32.mrf.mxu0
        %v1557 = vadd.f32 %v1517, %v1556
        %v1558 = vand.u32 %v1427, 4294901760
        %v1559 = vsub.f32 %v1427, %v1558
        %1560 = vmatmul.f32.gmra.mxu0 %v1559
        %v1561 = vpop.f32.mrf.mxu0
        %v1562 = vadd.f32 %v1521, %v1561
        %1563 = vdwg.mxu0
        %1564 = vmatpush.msra.mxu0 0.0
        %1565 = vmatpush.msra.mxu0 0.0
        %1566 = vmatpush.msra.mxu0 0.0
        %1567 = vmatpush.msra.mxu0 0.0
        %1568 = vmatpush.msra.mxu0 0.0
        %1569 = vmatpush.msra.mxu0 0.0
        %1570 = vmatpush.msra.mxu0 0.0
        %1571 = vmatpush.msra.mxu0 0.0
        %1572 = vmatpush.msra.mxu0 0.0
        %1573 = vmatpush.msra.mxu0 0.0
        %1574 = vmatpush.msra.mxu0 0.0
        %1575 = vmatpush.msra.mxu0 0.0
        %1576 = vmatpush.msra.mxu0 0.0
        %1577 = vmatpush.msra.mxu0 0.0
        %v1578 = vand.u32 %v645, 4294901760
        %1579 = vmatpush.msra.mxu0 %v1578
        %v1580 = vand.u32 %v641, 4294901760
        %1581 = vmatpush.msra.mxu0 %v1580
        %v1582 = vand.u32 %v1418, 4294901760
        %v1583 = vsub.f32 %v1418, %v1582
        %v1584 = vand.u32 %v1583, 4294901760
        %1585 = vmatmul.f32.gmra.mxu0 %v1584
        %v1586 = vpop.f32.mrf.mxu0
        %v1587 = vadd.f32 %v1547, %v1586
        %v1588 = vand.u32 %v1421, 4294901760
        %v1589 = vsub.f32 %v1421, %v1588
        %v1590 = vand.u32 %v1589, 4294901760
        %1591 = vmatmul.f32.gmra.mxu0 %v1590
        %v1592 = vpop.f32.mrf.mxu0
        %v1593 = vadd.f32 %v1552, %v1592
        %v1594 = vand.u32 %v1424, 4294901760
        %v1595 = vsub.f32 %v1424, %v1594
        %v1596 = vand.u32 %v1595, 4294901760
        %1597 = vmatmul.f32.gmra.mxu0 %v1596
        %v1598 = vpop.f32.mrf.mxu0
        %v1599 = vadd.f32 %v1557, %v1598
        %v1600 = vand.u32 %v1427, 4294901760
        %v1601 = vsub.f32 %v1427, %v1600
        %v1602 = vand.u32 %v1601, 4294901760
        %1603 = vmatmul.f32.gmra.mxu0 %v1602
        %v1604 = vpop.f32.mrf.mxu0
        %v1605 = vadd.f32 %v1562, %v1604
        %1606 = vdwg.mxu0
        %1607 = vmatpush.msra.mxu0 0.0
        %1608 = vmatpush.msra.mxu0 0.0
        %1609 = vmatpush.msra.mxu0 0.0
        %1610 = vmatpush.msra.mxu0 0.0
        %1611 = vmatpush.msra.mxu0 0.0
        %1612 = vmatpush.msra.mxu0 0.0
        %1613 = vmatpush.msra.mxu0 0.0
        %1614 = vmatpush.msra.mxu0 0.0
        %1615 = vmatpush.msra.mxu0 0.0
        %1616 = vmatpush.msra.mxu0 0.0
        %1617 = vmatpush.msra.mxu0 0.0
        %1618 = vmatpush.msra.mxu0 0.0
        %1619 = vmatpush.msra.mxu0 0.0
        %1620 = vmatpush.msra.mxu0 0.0
        %v1621 = vand.u32 %v645, 4294901760
        %v1622 = vsub.f32 %v645, %v1621
        %v1623 = vand.u32 %v1622, 4294901760
        %1624 = vmatpush.msra.mxu0 %v1623
        %v1625 = vand.u32 %v641, 4294901760
        %v1626 = vsub.f32 %v641, %v1625
        %v1627 = vand.u32 %v1626, 4294901760
        %1628 = vmatpush.msra.mxu0 %v1627
        %v1629 = vand.u32 %v1418, 4294901760
        %1630 = vmatmul.f32.gmra.mxu0 %v1629
        %v1631 = vpop.f32.mrf.mxu0
        %v1632 = vadd.f32 %v1587, %v1631
        %v1633 = vand.u32 %v1421, 4294901760
        %1634 = vmatmul.f32.gmra.mxu0 %v1633
        %v1635 = vpop.f32.mrf.mxu0
        %v1636 = vadd.f32 %v1593, %v1635
        %v1637 = vand.u32 %v1424, 4294901760
        %1638 = vmatmul.f32.gmra.mxu0 %v1637
        %v1639 = vpop.f32.mrf.mxu0
        %v1640 = vadd.f32 %v1599, %v1639
        %v1641 = vand.u32 %v1427, 4294901760
        %1642 = vmatmul.f32.gmra.mxu0 %v1641
        %v1643 = vpop.f32.mrf.mxu0
        %v1644 = vadd.f32 %v1605, %v1643
        %1645 = vdwg.mxu0
        %1646 = vmatpush.msra.mxu0 0.0
        %1647 = vmatpush.msra.mxu0 0.0
        %1648 = vmatpush.msra.mxu0 0.0
        %1649 = vmatpush.msra.mxu0 0.0
        %1650 = vmatpush.msra.mxu0 0.0
        %1651 = vmatpush.msra.mxu0 0.0
        %1652 = vmatpush.msra.mxu0 0.0
        %1653 = vmatpush.msra.mxu0 0.0
        %1654 = vmatpush.msra.mxu0 0.0
        %1655 = vmatpush.msra.mxu0 0.0
        %1656 = vmatpush.msra.mxu0 0.0
        %1657 = vmatpush.msra.mxu0 0.0
        %1658 = vmatpush.msra.mxu0 0.0
        %1659 = vmatpush.msra.mxu0 0.0
        %v1660 = vand.u32 %v645, 4294901760
        %1661 = vmatpush.msra.mxu0 %v1660
        %v1662 = vand.u32 %v641, 4294901760
        %1663 = vmatpush.msra.mxu0 %v1662
        %v1664 = vand.u32 %v1418, 4294901760
        %1665 = vmatmul.f32.gmra.mxu0 %v1664
        %v1666 = vpop.f32.mrf.mxu0
        %v1667 = vadd.f32 %v1632, %v1666
        %v1668 = vand.u32 %v1421, 4294901760
        %1669 = vmatmul.f32.gmra.mxu0 %v1668
        %v1670 = vpop.f32.mrf.mxu0
        %v1671 = vadd.f32 %v1636, %v1670
        %v1672 = vand.u32 %v1424, 4294901760
        %1673 = vmatmul.f32.gmra.mxu0 %v1672
        %v1674 = vpop.f32.mrf.mxu0
        %v1675 = vadd.f32 %v1640, %v1674
        %v1676 = vand.u32 %v1427, 4294901760
        %1677 = vmatmul.f32.gmra.mxu0 %v1676
        %v1678 = vpop.f32.mrf.mxu0
        %v1679 = vadd.f32 %v1644, %v1678
        %1680 = vdwg.mxu0
        %1681 = vmatpush.msra.mxu0 0.0
        %1682 = vmatpush.msra.mxu0 0.0
        %1683 = vmatpush.msra.mxu0 0.0
        %1684 = vmatpush.msra.mxu0 0.0
        %1685 = vmatpush.msra.mxu0 0.0
        %1686 = vmatpush.msra.mxu0 0.0
        %1687 = vmatpush.msra.mxu0 0.0
        %1688 = vmatpush.msra.mxu0 0.0
        %1689 = vmatpush.msra.mxu0 0.0
        %1690 = vmatpush.msra.mxu0 0.0
        %1691 = vmatpush.msra.mxu0 0.0
        %1692 = vmatpush.msra.mxu0 0.0
        %1693 = vmatpush.msra.mxu0 0.0
        %1694 = vmatpush.msra.mxu0 0.0
        %v1695 = vand.u32 %v822, 4294901760
        %1696 = vmatpush.msra.mxu0 %v1695
        %v1697 = vand.u32 %v818, 4294901760
        %1698 = vmatpush.msra.mxu0 %v1697
        %v1699 = vand.u32 %v1418, 4294901760
        %v1700 = vsub.f32 %v1418, %v1699
        %v1701 = vand.u32 %v1700, 4294901760
        %v1702 = vsub.f32 %v1700, %v1701
        %v1703 = vand.u32 %v1702, 4294901760
        %1704 = vmatmul.f32.gmra.mxu0 %v1703
        %v1705 = vpop.f32.mrf.mxu0
        %v1706 = vadd.f32 0.0, %v1705
        %v1707 = vand.u32 %v1421, 4294901760
        %v1708 = vsub.f32 %v1421, %v1707
        %v1709 = vand.u32 %v1708, 4294901760
        %v1710 = vsub.f32 %v1708, %v1709
        %v1711 = vand.u32 %v1710, 4294901760
        %1712 = vmatmul.f32.gmra.mxu0 %v1711
        %v1713 = vpop.f32.mrf.mxu0
        %v1714 = vadd.f32 0.0, %v1713
        %v1715 = vand.u32 %v1424, 4294901760
        %v1716 = vsub.f32 %v1424, %v1715
        %v1717 = vand.u32 %v1716, 4294901760
        %v1718 = vsub.f32 %v1716, %v1717
        %v1719 = vand.u32 %v1718, 4294901760
        %1720 = vmatmul.f32.gmra.mxu0 %v1719
        %v1721 = vpop.f32.mrf.mxu0
        %v1722 = vadd.f32 0.0, %v1721
        %v1723 = vand.u32 %v1427, 4294901760
        %v1724 = vsub.f32 %v1427, %v1723
        %v1725 = vand.u32 %v1724, 4294901760
        %v1726 = vsub.f32 %v1724, %v1725
        %v1727 = vand.u32 %v1726, 4294901760
        %1728 = vmatmul.f32.gmra.mxu0 %v1727
        %v1729 = vpop.f32.mrf.mxu0
        %v1730 = vadd.f32 0.0, %v1729
        %1731 = vdwg.mxu0
        %1732 = vmatpush.msra.mxu0 0.0
        %1733 = vmatpush.msra.mxu0 0.0
        %1734 = vmatpush.msra.mxu0 0.0
        %1735 = vmatpush.msra.mxu0 0.0
        %1736 = vmatpush.msra.mxu0 0.0
        %1737 = vmatpush.msra.mxu0 0.0
        %1738 = vmatpush.msra.mxu0 0.0
        %1739 = vmatpush.msra.mxu0 0.0
        %1740 = vmatpush.msra.mxu0 0.0
        %1741 = vmatpush.msra.mxu0 0.0
        %1742 = vmatpush.msra.mxu0 0.0
        %1743 = vmatpush.msra.mxu0 0.0
        %1744 = vmatpush.msra.mxu0 0.0
        %1745 = vmatpush.msra.mxu0 0.0
        %v1746 = vand.u32 %v822, 4294901760
        %v1747 = vsub.f32 %v822, %v1746
        %v1748 = vand.u32 %v1747, 4294901760
        %v1749 = vsub.f32 %v1747, %v1748
        %v1750 = vand.u32 %v1749, 4294901760
        %1751 = vmatpush.msra.mxu0 %v1750
        %v1752 = vand.u32 %v818, 4294901760
        %v1753 = vsub.f32 %v818, %v1752
        %v1754 = vand.u32 %v1753, 4294901760
        %v1755 = vsub.f32 %v1753, %v1754
        %v1756 = vand.u32 %v1755, 4294901760
        %1757 = vmatpush.msra.mxu0 %v1756
        %v1758 = vand.u32 %v1418, 4294901760
        %1759 = vmatmul.f32.gmra.mxu0 %v1758
        %v1760 = vpop.f32.mrf.mxu0
        %v1761 = vadd.f32 %v1706, %v1760
        %v1762 = vand.u32 %v1421, 4294901760
        %1763 = vmatmul.f32.gmra.mxu0 %v1762
        %v1764 = vpop.f32.mrf.mxu0
        %v1765 = vadd.f32 %v1714, %v1764
        %v1766 = vand.u32 %v1424, 4294901760
        %1767 = vmatmul.f32.gmra.mxu0 %v1766
        %v1768 = vpop.f32.mrf.mxu0
        %v1769 = vadd.f32 %v1722, %v1768
        %v1770 = vand.u32 %v1427, 4294901760
        %1771 = vmatmul.f32.gmra.mxu0 %v1770
        %v1772 = vpop.f32.mrf.mxu0
        %v1773 = vadd.f32 %v1730, %v1772
        %1774 = vdwg.mxu0
        %1775 = vmatpush.msra.mxu0 0.0
        %1776 = vmatpush.msra.mxu0 0.0
        %1777 = vmatpush.msra.mxu0 0.0
        %1778 = vmatpush.msra.mxu0 0.0
        %1779 = vmatpush.msra.mxu0 0.0
        %1780 = vmatpush.msra.mxu0 0.0
        %1781 = vmatpush.msra.mxu0 0.0
        %1782 = vmatpush.msra.mxu0 0.0
        %1783 = vmatpush.msra.mxu0 0.0
        %1784 = vmatpush.msra.mxu0 0.0
        %1785 = vmatpush.msra.mxu0 0.0
        %1786 = vmatpush.msra.mxu0 0.0
        %1787 = vmatpush.msra.mxu0 0.0
        %1788 = vmatpush.msra.mxu0 0.0
        %v1789 = vand.u32 %v822, 4294901760
        %v1790 = vsub.f32 %v822, %v1789
        %1791 = vmatpush.msra.mxu0 %v1790
        %v1792 = vand.u32 %v818, 4294901760
        %v1793 = vsub.f32 %v818, %v1792
        %1794 = vmatpush.msra.mxu0 %v1793
        %v1795 = vand.u32 %v1418, 4294901760
        %v1796 = vsub.f32 %v1418, %v1795
        %1797 = vmatmul.f32.gmra.mxu0 %v1796
        %v1798 = vpop.f32.mrf.mxu0
        %v1799 = vadd.f32 %v1761, %v1798
        %v1800 = vand.u32 %v1421, 4294901760
        %v1801 = vsub.f32 %v1421, %v1800
        %1802 = vmatmul.f32.gmra.mxu0 %v1801
        %v1803 = vpop.f32.mrf.mxu0
        %v1804 = vadd.f32 %v1765, %v1803
        %v1805 = vand.u32 %v1424, 4294901760
        %v1806 = vsub.f32 %v1424, %v1805
        %1807 = vmatmul.f32.gmra.mxu0 %v1806
        %v1808 = vpop.f32.mrf.mxu0
        %v1809 = vadd.f32 %v1769, %v1808
        %v1810 = vand.u32 %v1427, 4294901760
        %v1811 = vsub.f32 %v1427, %v1810
        %1812 = vmatmul.f32.gmra.mxu0 %v1811
        %v1813 = vpop.f32.mrf.mxu0
        %v1814 = vadd.f32 %v1773, %v1813
        %1815 = vdwg.mxu0
        %1816 = vmatpush.msra.mxu0 0.0
        %1817 = vmatpush.msra.mxu0 0.0
        %1818 = vmatpush.msra.mxu0 0.0
        %1819 = vmatpush.msra.mxu0 0.0
        %1820 = vmatpush.msra.mxu0 0.0
        %1821 = vmatpush.msra.mxu0 0.0
        %1822 = vmatpush.msra.mxu0 0.0
        %1823 = vmatpush.msra.mxu0 0.0
        %1824 = vmatpush.msra.mxu0 0.0
        %1825 = vmatpush.msra.mxu0 0.0
        %1826 = vmatpush.msra.mxu0 0.0
        %1827 = vmatpush.msra.mxu0 0.0
        %1828 = vmatpush.msra.mxu0 0.0
        %1829 = vmatpush.msra.mxu0 0.0
        %v1830 = vand.u32 %v822, 4294901760
        %1831 = vmatpush.msra.mxu0 %v1830
        %v1832 = vand.u32 %v818, 4294901760
        %1833 = vmatpush.msra.mxu0 %v1832
        %v1834 = vand.u32 %v1418, 4294901760
        %v1835 = vsub.f32 %v1418, %v1834
        %v1836 = vand.u32 %v1835, 4294901760
        %1837 = vmatmul.f32.gmra.mxu0 %v1836
        %v1838 = vpop.f32.mrf.mxu0
        %v1839 = vadd.f32 %v1799, %v1838
        %v1840 = vand.u32 %v1421, 4294901760
        %v1841 = vsub.f32 %v1421, %v1840
        %v1842 = vand.u32 %v1841, 4294901760
        %1843 = vmatmul.f32.gmra.mxu0 %v1842
        %v1844 = vpop.f32.mrf.mxu0
        %v1845 = vadd.f32 %v1804, %v1844
        %v1846 = vand.u32 %v1424, 4294901760
        %v1847 = vsub.f32 %v1424, %v1846
        %v1848 = vand.u32 %v1847, 4294901760
        %1849 = vmatmul.f32.gmra.mxu0 %v1848
        %v1850 = vpop.f32.mrf.mxu0
        %v1851 = vadd.f32 %v1809, %v1850
        %v1852 = vand.u32 %v1427, 4294901760
        %v1853 = vsub.f32 %v1427, %v1852
        %v1854 = vand.u32 %v1853, 4294901760
        %1855 = vmatmul.f32.gmra.mxu0 %v1854
        %v1856 = vpop.f32.mrf.mxu0
        %v1857 = vadd.f32 %v1814, %v1856
        %1858 = vdwg.mxu0
        %1859 = vmatpush.msra.mxu0 0.0
        %1860 = vmatpush.msra.mxu0 0.0
        %1861 = vmatpush.msra.mxu0 0.0
        %1862 = vmatpush.msra.mxu0 0.0
        %1863 = vmatpush.msra.mxu0 0.0
        %1864 = vmatpush.msra.mxu0 0.0
        %1865 = vmatpush.msra.mxu0 0.0
        %1866 = vmatpush.msra.mxu0 0.0
        %1867 = vmatpush.msra.mxu0 0.0
        %1868 = vmatpush.msra.mxu0 0.0
        %1869 = vmatpush.msra.mxu0 0.0
        %1870 = vmatpush.msra.mxu0 0.0
        %1871 = vmatpush.msra.mxu0 0.0
        %1872 = vmatpush.msra.mxu0 0.0
        %v1873 = vand.u32 %v822, 4294901760
        %v1874 = vsub.f32 %v822, %v1873
        %v1875 = vand.u32 %v1874, 4294901760
        %1876 = vmatpush.msra.mxu0 %v1875
        %v1877 = vand.u32 %v818, 4294901760
        %v1878 = vsub.f32 %v818, %v1877
        %v1879 = vand.u32 %v1878, 4294901760
        %1880 = vmatpush.msra.mxu0 %v1879
        %v1881 = vand.u32 %v1418, 4294901760
        %1882 = vmatmul.f32.gmra.mxu0 %v1881
        %v1883 = vpop.f32.mrf.mxu0
        %v1884 = vadd.f32 %v1839, %v1883
        %v1885 = vand.u32 %v1421, 4294901760
        %1886 = vmatmul.f32.gmra.mxu0 %v1885
        %v1887 = vpop.f32.mrf.mxu0
        %v1888 = vadd.f32 %v1845, %v1887
        %v1889 = vand.u32 %v1424, 4294901760
        %1890 = vmatmul.f32.gmra.mxu0 %v1889
        %v1891 = vpop.f32.mrf.mxu0
        %v1892 = vadd.f32 %v1851, %v1891
        %v1893 = vand.u32 %v1427, 4294901760
        %1894 = vmatmul.f32.gmra.mxu0 %v1893
        %v1895 = vpop.f32.mrf.mxu0
        %v1896 = vadd.f32 %v1857, %v1895
        %1897 = vdwg.mxu0
        %1898 = vmatpush.msra.mxu0 0.0
        %1899 = vmatpush.msra.mxu0 0.0
        %1900 = vmatpush.msra.mxu0 0.0
        %1901 = vmatpush.msra.mxu0 0.0
        %1902 = vmatpush.msra.mxu0 0.0
        %1903 = vmatpush.msra.mxu0 0.0
        %1904 = vmatpush.msra.mxu0 0.0
        %1905 = vmatpush.msra.mxu0 0.0
        %1906 = vmatpush.msra.mxu0 0.0
        %1907 = vmatpush.msra.mxu0 0.0
        %1908 = vmatpush.msra.mxu0 0.0
        %1909 = vmatpush.msra.mxu0 0.0
        %1910 = vmatpush.msra.mxu0 0.0
        %1911 = vmatpush.msra.mxu0 0.0
        %v1912 = vand.u32 %v822, 4294901760
        %1913 = vmatpush.msra.mxu0 %v1912
        %v1914 = vand.u32 %v818, 4294901760
        %1915 = vmatpush.msra.mxu0 %v1914
        %v1916 = vand.u32 %v1418, 4294901760
        %1917 = vmatmul.f32.gmra.mxu0 %v1916
        %v1918 = vpop.f32.mrf.mxu0
        %v1919 = vadd.f32 %v1884, %v1918
        %v1920 = vand.u32 %v1421, 4294901760
        %1921 = vmatmul.f32.gmra.mxu0 %v1920
        %v1922 = vpop.f32.mrf.mxu0
        %v1923 = vadd.f32 %v1888, %v1922
        %v1924 = vand.u32 %v1424, 4294901760
        %1925 = vmatmul.f32.gmra.mxu0 %v1924
        %v1926 = vpop.f32.mrf.mxu0
        %v1927 = vadd.f32 %v1892, %v1926
        %v1928 = vand.u32 %v1427, 4294901760
        %1929 = vmatmul.f32.gmra.mxu0 %v1928
        %v1930 = vpop.f32.mrf.mxu0
        %v1931 = vadd.f32 %v1896, %v1930
        %1932 = vdwg.mxu0
        %vm1933 = vcmask 261120
        %v1935 = vsel %vm1933, %v1409, 0
        %v1938 = vsel %vm1933, %v1410, 0
        %v1941 = vsel %vm1933, %v1411, 0
        %v1944 = vsel %vm1933, %v1412, 0
        %1946 = vmatpush.msra.mxu0 0.0
        %1947 = vmatpush.msra.mxu0 0.0
        %1948 = vmatpush.msra.mxu0 0.0
        %1949 = vmatpush.msra.mxu0 0.0
        %1950 = vmatpush.msra.mxu0 0.0
        %1951 = vmatpush.msra.mxu0 0.0
        %1952 = vmatpush.msra.mxu0 0.0
        %1953 = vmatpush.msra.mxu0 0.0
        %1954 = vmatpush.msra.mxu0 0.0
        %1955 = vmatpush.msra.mxu0 0.0
        %1956 = vmatpush.msra.mxu0 0.0
        %1957 = vmatpush.msra.mxu0 0.0
        %v1958 = vand.u32 %v1407, 4294901760
        %1959 = vmatpush.msra.mxu0 %v1958
        %v1960 = vand.u32 %v1405, 4294901760
        %1961 = vmatpush.msra.mxu0 %v1960
        %v1962 = vand.u32 %v1403, 4294901760
        %1963 = vmatpush.msra.mxu0 %v1962
        %v1964 = vand.u32 %v1401, 4294901760
        %1965 = vmatpush.msra.mxu0 %v1964
        %v1966 = vand.u32 %v1935, 4294901760
        %v1967 = vsub.f32 %v1935, %v1966
        %v1968 = vand.u32 %v1967, 4294901760
        %v1969 = vsub.f32 %v1967, %v1968
        %v1970 = vand.u32 %v1969, 4294901760
        %1971 = vmatmul.f32.gmra.mxu0 %v1970
        %v1972 = vpop.f32.mrf.mxu0
        %v1973 = vadd.f32 %v1667, %v1972
        %v1974 = vand.u32 %v1938, 4294901760
        %v1975 = vsub.f32 %v1938, %v1974
        %v1976 = vand.u32 %v1975, 4294901760
        %v1977 = vsub.f32 %v1975, %v1976
        %v1978 = vand.u32 %v1977, 4294901760
        %1979 = vmatmul.f32.gmra.mxu0 %v1978
        %v1980 = vpop.f32.mrf.mxu0
        %v1981 = vadd.f32 %v1671, %v1980
        %v1982 = vand.u32 %v1941, 4294901760
        %v1983 = vsub.f32 %v1941, %v1982
        %v1984 = vand.u32 %v1983, 4294901760
        %v1985 = vsub.f32 %v1983, %v1984
        %v1986 = vand.u32 %v1985, 4294901760
        %1987 = vmatmul.f32.gmra.mxu0 %v1986
        %v1988 = vpop.f32.mrf.mxu0
        %v1989 = vadd.f32 %v1675, %v1988
        %v1990 = vand.u32 %v1944, 4294901760
        %v1991 = vsub.f32 %v1944, %v1990
        %v1992 = vand.u32 %v1991, 4294901760
        %v1993 = vsub.f32 %v1991, %v1992
        %v1994 = vand.u32 %v1993, 4294901760
        %1995 = vmatmul.f32.gmra.mxu0 %v1994
        %v1996 = vpop.f32.mrf.mxu0
        %v1997 = vadd.f32 %v1679, %v1996
        %1998 = vdwg.mxu0
        %1999 = vmatpush.msra.mxu0 0.0
        %2000 = vmatpush.msra.mxu0 0.0
        %2001 = vmatpush.msra.mxu0 0.0
        %2002 = vmatpush.msra.mxu0 0.0
        %2003 = vmatpush.msra.mxu0 0.0
        %2004 = vmatpush.msra.mxu0 0.0
        %2005 = vmatpush.msra.mxu0 0.0
        %2006 = vmatpush.msra.mxu0 0.0
        %2007 = vmatpush.msra.mxu0 0.0
        %2008 = vmatpush.msra.mxu0 0.0
        %2009 = vmatpush.msra.mxu0 0.0
        %2010 = vmatpush.msra.mxu0 0.0
        %v2011 = vand.u32 %v1407, 4294901760
        %v2012 = vsub.f32 %v1407, %v2011
        %v2013 = vand.u32 %v2012, 4294901760
        %v2014 = vsub.f32 %v2012, %v2013
        %v2015 = vand.u32 %v2014, 4294901760
        %2016 = vmatpush.msra.mxu0 %v2015
        %v2017 = vand.u32 %v1405, 4294901760
        %v2018 = vsub.f32 %v1405, %v2017
        %v2019 = vand.u32 %v2018, 4294901760
        %v2020 = vsub.f32 %v2018, %v2019
        %v2021 = vand.u32 %v2020, 4294901760
        %2022 = vmatpush.msra.mxu0 %v2021
        %v2023 = vand.u32 %v1403, 4294901760
        %v2024 = vsub.f32 %v1403, %v2023
        %v2025 = vand.u32 %v2024, 4294901760
        %v2026 = vsub.f32 %v2024, %v2025
        %v2027 = vand.u32 %v2026, 4294901760
        %2028 = vmatpush.msra.mxu0 %v2027
        %v2029 = vand.u32 %v1401, 4294901760
        %v2030 = vsub.f32 %v1401, %v2029
        %v2031 = vand.u32 %v2030, 4294901760
        %v2032 = vsub.f32 %v2030, %v2031
        %v2033 = vand.u32 %v2032, 4294901760
        %2034 = vmatpush.msra.mxu0 %v2033
        %v2035 = vand.u32 %v1935, 4294901760
        %2036 = vmatmul.f32.gmra.mxu0 %v2035
        %v2037 = vpop.f32.mrf.mxu0
        %v2038 = vadd.f32 %v1973, %v2037
        %v2039 = vand.u32 %v1938, 4294901760
        %2040 = vmatmul.f32.gmra.mxu0 %v2039
        %v2041 = vpop.f32.mrf.mxu0
        %v2042 = vadd.f32 %v1981, %v2041
        %v2043 = vand.u32 %v1941, 4294901760
        %2044 = vmatmul.f32.gmra.mxu0 %v2043
        %v2045 = vpop.f32.mrf.mxu0
        %v2046 = vadd.f32 %v1989, %v2045
        %v2047 = vand.u32 %v1944, 4294901760
        %2048 = vmatmul.f32.gmra.mxu0 %v2047
        %v2049 = vpop.f32.mrf.mxu0
        %v2050 = vadd.f32 %v1997, %v2049
        %2051 = vdwg.mxu0
        %2052 = vmatpush.msra.mxu0 0.0
        %2053 = vmatpush.msra.mxu0 0.0
        %2054 = vmatpush.msra.mxu0 0.0
        %2055 = vmatpush.msra.mxu0 0.0
        %2056 = vmatpush.msra.mxu0 0.0
        %2057 = vmatpush.msra.mxu0 0.0
        %2058 = vmatpush.msra.mxu0 0.0
        %2059 = vmatpush.msra.mxu0 0.0
        %2060 = vmatpush.msra.mxu0 0.0
        %2061 = vmatpush.msra.mxu0 0.0
        %2062 = vmatpush.msra.mxu0 0.0
        %2063 = vmatpush.msra.mxu0 0.0
        %v2064 = vand.u32 %v1407, 4294901760
        %v2065 = vsub.f32 %v1407, %v2064
        %2066 = vmatpush.msra.mxu0 %v2065
        %v2067 = vand.u32 %v1405, 4294901760
        %v2068 = vsub.f32 %v1405, %v2067
        %2069 = vmatpush.msra.mxu0 %v2068
        %v2070 = vand.u32 %v1403, 4294901760
        %v2071 = vsub.f32 %v1403, %v2070
        %2072 = vmatpush.msra.mxu0 %v2071
        %v2073 = vand.u32 %v1401, 4294901760
        %v2074 = vsub.f32 %v1401, %v2073
        %2075 = vmatpush.msra.mxu0 %v2074
        %v2076 = vand.u32 %v1935, 4294901760
        %v2077 = vsub.f32 %v1935, %v2076
        %2078 = vmatmul.f32.gmra.mxu0 %v2077
        %v2079 = vpop.f32.mrf.mxu0
        %v2080 = vadd.f32 %v2038, %v2079
        %v2081 = vand.u32 %v1938, 4294901760
        %v2082 = vsub.f32 %v1938, %v2081
        %2083 = vmatmul.f32.gmra.mxu0 %v2082
        %v2084 = vpop.f32.mrf.mxu0
        %v2085 = vadd.f32 %v2042, %v2084
        %v2086 = vand.u32 %v1941, 4294901760
        %v2087 = vsub.f32 %v1941, %v2086
        %2088 = vmatmul.f32.gmra.mxu0 %v2087
        %v2089 = vpop.f32.mrf.mxu0
        %v2090 = vadd.f32 %v2046, %v2089
        %v2091 = vand.u32 %v1944, 4294901760
        %v2092 = vsub.f32 %v1944, %v2091
        %2093 = vmatmul.f32.gmra.mxu0 %v2092
        %v2094 = vpop.f32.mrf.mxu0
        %v2095 = vadd.f32 %v2050, %v2094
        %2096 = vdwg.mxu0
        %2097 = vmatpush.msra.mxu0 0.0
        %2098 = vmatpush.msra.mxu0 0.0
        %2099 = vmatpush.msra.mxu0 0.0
        %2100 = vmatpush.msra.mxu0 0.0
        %2101 = vmatpush.msra.mxu0 0.0
        %2102 = vmatpush.msra.mxu0 0.0
        %2103 = vmatpush.msra.mxu0 0.0
        %2104 = vmatpush.msra.mxu0 0.0
        %2105 = vmatpush.msra.mxu0 0.0
        %2106 = vmatpush.msra.mxu0 0.0
        %2107 = vmatpush.msra.mxu0 0.0
        %2108 = vmatpush.msra.mxu0 0.0
        %v2109 = vand.u32 %v1407, 4294901760
        %2110 = vmatpush.msra.mxu0 %v2109
        %v2111 = vand.u32 %v1405, 4294901760
        %2112 = vmatpush.msra.mxu0 %v2111
        %v2113 = vand.u32 %v1403, 4294901760
        %2114 = vmatpush.msra.mxu0 %v2113
        %v2115 = vand.u32 %v1401, 4294901760
        %2116 = vmatpush.msra.mxu0 %v2115
        %v2117 = vand.u32 %v1935, 4294901760
        %v2118 = vsub.f32 %v1935, %v2117
        %v2119 = vand.u32 %v2118, 4294901760
        %2120 = vmatmul.f32.gmra.mxu0 %v2119
        %v2121 = vpop.f32.mrf.mxu0
        %v2122 = vadd.f32 %v2080, %v2121
        %v2123 = vand.u32 %v1938, 4294901760
        %v2124 = vsub.f32 %v1938, %v2123
        %v2125 = vand.u32 %v2124, 4294901760
        %2126 = vmatmul.f32.gmra.mxu0 %v2125
        %v2127 = vpop.f32.mrf.mxu0
        %v2128 = vadd.f32 %v2085, %v2127
        %v2129 = vand.u32 %v1941, 4294901760
        %v2130 = vsub.f32 %v1941, %v2129
        %v2131 = vand.u32 %v2130, 4294901760
        %2132 = vmatmul.f32.gmra.mxu0 %v2131
        %v2133 = vpop.f32.mrf.mxu0
        %v2134 = vadd.f32 %v2090, %v2133
        %v2135 = vand.u32 %v1944, 4294901760
        %v2136 = vsub.f32 %v1944, %v2135
        %v2137 = vand.u32 %v2136, 4294901760
        %2138 = vmatmul.f32.gmra.mxu0 %v2137
        %v2139 = vpop.f32.mrf.mxu0
        %v2140 = vadd.f32 %v2095, %v2139
        %2141 = vdwg.mxu0
        %2142 = vmatpush.msra.mxu0 0.0
        %2143 = vmatpush.msra.mxu0 0.0
        %2144 = vmatpush.msra.mxu0 0.0
        %2145 = vmatpush.msra.mxu0 0.0
        %2146 = vmatpush.msra.mxu0 0.0
        %2147 = vmatpush.msra.mxu0 0.0
        %2148 = vmatpush.msra.mxu0 0.0
        %2149 = vmatpush.msra.mxu0 0.0
        %2150 = vmatpush.msra.mxu0 0.0
        %2151 = vmatpush.msra.mxu0 0.0
        %2152 = vmatpush.msra.mxu0 0.0
        %2153 = vmatpush.msra.mxu0 0.0
        %v2154 = vand.u32 %v1407, 4294901760
        %v2155 = vsub.f32 %v1407, %v2154
        %v2156 = vand.u32 %v2155, 4294901760
        %2157 = vmatpush.msra.mxu0 %v2156
        %v2158 = vand.u32 %v1405, 4294901760
        %v2159 = vsub.f32 %v1405, %v2158
        %v2160 = vand.u32 %v2159, 4294901760
        %2161 = vmatpush.msra.mxu0 %v2160
        %v2162 = vand.u32 %v1403, 4294901760
        %v2163 = vsub.f32 %v1403, %v2162
        %v2164 = vand.u32 %v2163, 4294901760
        %2165 = vmatpush.msra.mxu0 %v2164
        %v2166 = vand.u32 %v1401, 4294901760
        %v2167 = vsub.f32 %v1401, %v2166
        %v2168 = vand.u32 %v2167, 4294901760
        %2169 = vmatpush.msra.mxu0 %v2168
        %v2170 = vand.u32 %v1935, 4294901760
        %2171 = vmatmul.f32.gmra.mxu0 %v2170
        %v2172 = vpop.f32.mrf.mxu0
        %v2173 = vadd.f32 %v2122, %v2172
        %v2174 = vand.u32 %v1938, 4294901760
        %2175 = vmatmul.f32.gmra.mxu0 %v2174
        %v2176 = vpop.f32.mrf.mxu0
        %v2177 = vadd.f32 %v2128, %v2176
        %v2178 = vand.u32 %v1941, 4294901760
        %2179 = vmatmul.f32.gmra.mxu0 %v2178
        %v2180 = vpop.f32.mrf.mxu0
        %v2181 = vadd.f32 %v2134, %v2180
        %v2182 = vand.u32 %v1944, 4294901760
        %2183 = vmatmul.f32.gmra.mxu0 %v2182
        %v2184 = vpop.f32.mrf.mxu0
        %v2185 = vadd.f32 %v2140, %v2184
        %2186 = vdwg.mxu0
        %2187 = vmatpush.msra.mxu0 0.0
        %2188 = vmatpush.msra.mxu0 0.0
        %2189 = vmatpush.msra.mxu0 0.0
        %2190 = vmatpush.msra.mxu0 0.0
        %2191 = vmatpush.msra.mxu0 0.0
        %2192 = vmatpush.msra.mxu0 0.0
        %2193 = vmatpush.msra.mxu0 0.0
        %2194 = vmatpush.msra.mxu0 0.0
        %2195 = vmatpush.msra.mxu0 0.0
        %2196 = vmatpush.msra.mxu0 0.0
        %2197 = vmatpush.msra.mxu0 0.0
        %2198 = vmatpush.msra.mxu0 0.0
        %v2199 = vand.u32 %v1407, 4294901760
        %2200 = vmatpush.msra.mxu0 %v2199
        %v2201 = vand.u32 %v1405, 4294901760
        %2202 = vmatpush.msra.mxu0 %v2201
        %v2203 = vand.u32 %v1403, 4294901760
        %2204 = vmatpush.msra.mxu0 %v2203
        %v2205 = vand.u32 %v1401, 4294901760
        %2206 = vmatpush.msra.mxu0 %v2205
        %v2207 = vand.u32 %v1935, 4294901760
        %2208 = vmatmul.f32.gmra.mxu0 %v2207
        %v2209 = vpop.f32.mrf.mxu0
        %v2210 = vadd.f32 %v2173, %v2209
        %v2211 = vand.u32 %v1938, 4294901760
        %2212 = vmatmul.f32.gmra.mxu0 %v2211
        %v2213 = vpop.f32.mrf.mxu0
        %v2214 = vadd.f32 %v2177, %v2213
        %v2215 = vand.u32 %v1941, 4294901760
        %2216 = vmatmul.f32.gmra.mxu0 %v2215
        %v2217 = vpop.f32.mrf.mxu0
        %v2218 = vadd.f32 %v2181, %v2217
        %v2219 = vand.u32 %v1944, 4294901760
        %2220 = vmatmul.f32.gmra.mxu0 %v2219
        %v2221 = vpop.f32.mrf.mxu0
        %v2222 = vadd.f32 %v2185, %v2221
        %2223 = vdwg.mxu0
        %2224 = vmatpush.msra.mxu0 0.0
        %2225 = vmatpush.msra.mxu0 0.0
        %2226 = vmatpush.msra.mxu0 0.0
        %2227 = vmatpush.msra.mxu0 0.0
        %2228 = vmatpush.msra.mxu0 0.0
        %2229 = vmatpush.msra.mxu0 0.0
        %2230 = vmatpush.msra.mxu0 0.0
        %2231 = vmatpush.msra.mxu0 0.0
        %2232 = vmatpush.msra.mxu0 0.0
        %2233 = vmatpush.msra.mxu0 0.0
        %2234 = vmatpush.msra.mxu0 0.0
        %2235 = vmatpush.msra.mxu0 0.0
        %v2236 = vand.u32 %v1408, 4294901760
        %2237 = vmatpush.msra.mxu0 %v2236
        %v2238 = vand.u32 %v1406, 4294901760
        %2239 = vmatpush.msra.mxu0 %v2238
        %v2240 = vand.u32 %v1404, 4294901760
        %2241 = vmatpush.msra.mxu0 %v2240
        %v2242 = vand.u32 %v1402, 4294901760
        %2243 = vmatpush.msra.mxu0 %v2242
        %v2244 = vand.u32 %v1935, 4294901760
        %v2245 = vsub.f32 %v1935, %v2244
        %v2246 = vand.u32 %v2245, 4294901760
        %v2247 = vsub.f32 %v2245, %v2246
        %v2248 = vand.u32 %v2247, 4294901760
        %2249 = vmatmul.f32.gmra.mxu0 %v2248
        %v2250 = vpop.f32.mrf.mxu0
        %v2251 = vadd.f32 %v1919, %v2250
        %v2252 = vand.u32 %v1938, 4294901760
        %v2253 = vsub.f32 %v1938, %v2252
        %v2254 = vand.u32 %v2253, 4294901760
        %v2255 = vsub.f32 %v2253, %v2254
        %v2256 = vand.u32 %v2255, 4294901760
        %2257 = vmatmul.f32.gmra.mxu0 %v2256
        %v2258 = vpop.f32.mrf.mxu0
        %v2259 = vadd.f32 %v1923, %v2258
        %v2260 = vand.u32 %v1941, 4294901760
        %v2261 = vsub.f32 %v1941, %v2260
        %v2262 = vand.u32 %v2261, 4294901760
        %v2263 = vsub.f32 %v2261, %v2262
        %v2264 = vand.u32 %v2263, 4294901760
        %2265 = vmatmul.f32.gmra.mxu0 %v2264
        %v2266 = vpop.f32.mrf.mxu0
        %v2267 = vadd.f32 %v1927, %v2266
        %v2268 = vand.u32 %v1944, 4294901760
        %v2269 = vsub.f32 %v1944, %v2268
        %v2270 = vand.u32 %v2269, 4294901760
        %v2271 = vsub.f32 %v2269, %v2270
        %v2272 = vand.u32 %v2271, 4294901760
        %2273 = vmatmul.f32.gmra.mxu0 %v2272
        %v2274 = vpop.f32.mrf.mxu0
        %v2275 = vadd.f32 %v1931, %v2274
        %2276 = vdwg.mxu0
        %2277 = vmatpush.msra.mxu0 0.0
        %2278 = vmatpush.msra.mxu0 0.0
        %2279 = vmatpush.msra.mxu0 0.0
        %2280 = vmatpush.msra.mxu0 0.0
        %2281 = vmatpush.msra.mxu0 0.0
        %2282 = vmatpush.msra.mxu0 0.0
        %2283 = vmatpush.msra.mxu0 0.0
        %2284 = vmatpush.msra.mxu0 0.0
        %2285 = vmatpush.msra.mxu0 0.0
        %2286 = vmatpush.msra.mxu0 0.0
        %2287 = vmatpush.msra.mxu0 0.0
        %2288 = vmatpush.msra.mxu0 0.0
        %v2289 = vand.u32 %v1408, 4294901760
        %v2290 = vsub.f32 %v1408, %v2289
        %v2291 = vand.u32 %v2290, 4294901760
        %v2292 = vsub.f32 %v2290, %v2291
        %v2293 = vand.u32 %v2292, 4294901760
        %2294 = vmatpush.msra.mxu0 %v2293
        %v2295 = vand.u32 %v1406, 4294901760
        %v2296 = vsub.f32 %v1406, %v2295
        %v2297 = vand.u32 %v2296, 4294901760
        %v2298 = vsub.f32 %v2296, %v2297
        %v2299 = vand.u32 %v2298, 4294901760
        %2300 = vmatpush.msra.mxu0 %v2299
        %v2301 = vand.u32 %v1404, 4294901760
        %v2302 = vsub.f32 %v1404, %v2301
        %v2303 = vand.u32 %v2302, 4294901760
        %v2304 = vsub.f32 %v2302, %v2303
        %v2305 = vand.u32 %v2304, 4294901760
        %2306 = vmatpush.msra.mxu0 %v2305
        %v2307 = vand.u32 %v1402, 4294901760
        %v2308 = vsub.f32 %v1402, %v2307
        %v2309 = vand.u32 %v2308, 4294901760
        %v2310 = vsub.f32 %v2308, %v2309
        %v2311 = vand.u32 %v2310, 4294901760
        %2312 = vmatpush.msra.mxu0 %v2311
        %v2313 = vand.u32 %v1935, 4294901760
        %2314 = vmatmul.f32.gmra.mxu0 %v2313
        %v2315 = vpop.f32.mrf.mxu0
        %v2316 = vadd.f32 %v2251, %v2315
        %v2317 = vand.u32 %v1938, 4294901760
        %2318 = vmatmul.f32.gmra.mxu0 %v2317
        %v2319 = vpop.f32.mrf.mxu0
        %v2320 = vadd.f32 %v2259, %v2319
        %v2321 = vand.u32 %v1941, 4294901760
        %2322 = vmatmul.f32.gmra.mxu0 %v2321
        %v2323 = vpop.f32.mrf.mxu0
        %v2324 = vadd.f32 %v2267, %v2323
        %v2325 = vand.u32 %v1944, 4294901760
        %2326 = vmatmul.f32.gmra.mxu0 %v2325
        %v2327 = vpop.f32.mrf.mxu0
        %v2328 = vadd.f32 %v2275, %v2327
        %2329 = vdwg.mxu0
        %2330 = vmatpush.msra.mxu0 0.0
        %2331 = vmatpush.msra.mxu0 0.0
        %2332 = vmatpush.msra.mxu0 0.0
        %2333 = vmatpush.msra.mxu0 0.0
        %2334 = vmatpush.msra.mxu0 0.0
        %2335 = vmatpush.msra.mxu0 0.0
        %2336 = vmatpush.msra.mxu0 0.0
        %2337 = vmatpush.msra.mxu0 0.0
        %2338 = vmatpush.msra.mxu0 0.0
        %2339 = vmatpush.msra.mxu0 0.0
        %2340 = vmatpush.msra.mxu0 0.0
        %2341 = vmatpush.msra.mxu0 0.0
        %v2342 = vand.u32 %v1408, 4294901760
        %v2343 = vsub.f32 %v1408, %v2342
        %2344 = vmatpush.msra.mxu0 %v2343
        %v2345 = vand.u32 %v1406, 4294901760
        %v2346 = vsub.f32 %v1406, %v2345
        %2347 = vmatpush.msra.mxu0 %v2346
        %v2348 = vand.u32 %v1404, 4294901760
        %v2349 = vsub.f32 %v1404, %v2348
        %2350 = vmatpush.msra.mxu0 %v2349
        %v2351 = vand.u32 %v1402, 4294901760
        %v2352 = vsub.f32 %v1402, %v2351
        %2353 = vmatpush.msra.mxu0 %v2352
        %v2354 = vand.u32 %v1935, 4294901760
        %v2355 = vsub.f32 %v1935, %v2354
        %2356 = vmatmul.f32.gmra.mxu0 %v2355
        %v2357 = vpop.f32.mrf.mxu0
        %v2358 = vadd.f32 %v2316, %v2357
        %v2359 = vand.u32 %v1938, 4294901760
        %v2360 = vsub.f32 %v1938, %v2359
        %2361 = vmatmul.f32.gmra.mxu0 %v2360
        %v2362 = vpop.f32.mrf.mxu0
        %v2363 = vadd.f32 %v2320, %v2362
        %v2364 = vand.u32 %v1941, 4294901760
        %v2365 = vsub.f32 %v1941, %v2364
        %2366 = vmatmul.f32.gmra.mxu0 %v2365
        %v2367 = vpop.f32.mrf.mxu0
        %v2368 = vadd.f32 %v2324, %v2367
        %v2369 = vand.u32 %v1944, 4294901760
        %v2370 = vsub.f32 %v1944, %v2369
        %2371 = vmatmul.f32.gmra.mxu0 %v2370
        %v2372 = vpop.f32.mrf.mxu0
        %v2373 = vadd.f32 %v2328, %v2372
        %2374 = vdwg.mxu0
        %2375 = vmatpush.msra.mxu0 0.0
        %2376 = vmatpush.msra.mxu0 0.0
        %2377 = vmatpush.msra.mxu0 0.0
        %2378 = vmatpush.msra.mxu0 0.0
        %2379 = vmatpush.msra.mxu0 0.0
        %2380 = vmatpush.msra.mxu0 0.0
        %2381 = vmatpush.msra.mxu0 0.0
        %2382 = vmatpush.msra.mxu0 0.0
        %2383 = vmatpush.msra.mxu0 0.0
        %2384 = vmatpush.msra.mxu0 0.0
        %2385 = vmatpush.msra.mxu0 0.0
        %2386 = vmatpush.msra.mxu0 0.0
        %v2387 = vand.u32 %v1408, 4294901760
        %2388 = vmatpush.msra.mxu0 %v2387
        %v2389 = vand.u32 %v1406, 4294901760
        %2390 = vmatpush.msra.mxu0 %v2389
        %v2391 = vand.u32 %v1404, 4294901760
        %2392 = vmatpush.msra.mxu0 %v2391
        %v2393 = vand.u32 %v1402, 4294901760
        %2394 = vmatpush.msra.mxu0 %v2393
        %v2395 = vand.u32 %v1935, 4294901760
        %v2396 = vsub.f32 %v1935, %v2395
        %v2397 = vand.u32 %v2396, 4294901760
        %2398 = vmatmul.f32.gmra.mxu0 %v2397
        %v2399 = vpop.f32.mrf.mxu0
        %v2400 = vadd.f32 %v2358, %v2399
        %v2401 = vand.u32 %v1938, 4294901760
        %v2402 = vsub.f32 %v1938, %v2401
        %v2403 = vand.u32 %v2402, 4294901760
        %2404 = vmatmul.f32.gmra.mxu0 %v2403
        %v2405 = vpop.f32.mrf.mxu0
        %v2406 = vadd.f32 %v2363, %v2405
        %v2407 = vand.u32 %v1941, 4294901760
        %v2408 = vsub.f32 %v1941, %v2407
        %v2409 = vand.u32 %v2408, 4294901760
        %2410 = vmatmul.f32.gmra.mxu0 %v2409
        %v2411 = vpop.f32.mrf.mxu0
        %v2412 = vadd.f32 %v2368, %v2411
        %v2413 = vand.u32 %v1944, 4294901760
        %v2414 = vsub.f32 %v1944, %v2413
        %v2415 = vand.u32 %v2414, 4294901760
        %2416 = vmatmul.f32.gmra.mxu0 %v2415
        %v2417 = vpop.f32.mrf.mxu0
        %v2418 = vadd.f32 %v2373, %v2417
        %2419 = vdwg.mxu0
        %2420 = vmatpush.msra.mxu0 0.0
        %2421 = vmatpush.msra.mxu0 0.0
        %2422 = vmatpush.msra.mxu0 0.0
        %2423 = vmatpush.msra.mxu0 0.0
        %2424 = vmatpush.msra.mxu0 0.0
        %2425 = vmatpush.msra.mxu0 0.0
        %2426 = vmatpush.msra.mxu0 0.0
        %2427 = vmatpush.msra.mxu0 0.0
        %2428 = vmatpush.msra.mxu0 0.0
        %2429 = vmatpush.msra.mxu0 0.0
        %2430 = vmatpush.msra.mxu0 0.0
        %2431 = vmatpush.msra.mxu0 0.0
        %v2432 = vand.u32 %v1408, 4294901760
        %v2433 = vsub.f32 %v1408, %v2432
        %v2434 = vand.u32 %v2433, 4294901760
        %2435 = vmatpush.msra.mxu0 %v2434
        %v2436 = vand.u32 %v1406, 4294901760
        %v2437 = vsub.f32 %v1406, %v2436
        %v2438 = vand.u32 %v2437, 4294901760
        %2439 = vmatpush.msra.mxu0 %v2438
        %v2440 = vand.u32 %v1404, 4294901760
        %v2441 = vsub.f32 %v1404, %v2440
        %v2442 = vand.u32 %v2441, 4294901760
        %2443 = vmatpush.msra.mxu0 %v2442
        %v2444 = vand.u32 %v1402, 4294901760
        %v2445 = vsub.f32 %v1402, %v2444
        %v2446 = vand.u32 %v2445, 4294901760
        %2447 = vmatpush.msra.mxu0 %v2446
        %v2448 = vand.u32 %v1935, 4294901760
        %2449 = vmatmul.f32.gmra.mxu0 %v2448
        %v2450 = vpop.f32.mrf.mxu0
        %v2451 = vadd.f32 %v2400, %v2450
        %v2452 = vand.u32 %v1938, 4294901760
        %2453 = vmatmul.f32.gmra.mxu0 %v2452
        %v2454 = vpop.f32.mrf.mxu0
        %v2455 = vadd.f32 %v2406, %v2454
        %v2456 = vand.u32 %v1941, 4294901760
        %2457 = vmatmul.f32.gmra.mxu0 %v2456
        %v2458 = vpop.f32.mrf.mxu0
        %v2459 = vadd.f32 %v2412, %v2458
        %v2460 = vand.u32 %v1944, 4294901760
        %2461 = vmatmul.f32.gmra.mxu0 %v2460
        %v2462 = vpop.f32.mrf.mxu0
        %v2463 = vadd.f32 %v2418, %v2462
        %2464 = vdwg.mxu0
        %2465 = vmatpush.msra.mxu0 0.0
        %2466 = vmatpush.msra.mxu0 0.0
        %2467 = vmatpush.msra.mxu0 0.0
        %2468 = vmatpush.msra.mxu0 0.0
        %2469 = vmatpush.msra.mxu0 0.0
        %2470 = vmatpush.msra.mxu0 0.0
        %2471 = vmatpush.msra.mxu0 0.0
        %2472 = vmatpush.msra.mxu0 0.0
        %2473 = vmatpush.msra.mxu0 0.0
        %2474 = vmatpush.msra.mxu0 0.0
        %2475 = vmatpush.msra.mxu0 0.0
        %2476 = vmatpush.msra.mxu0 0.0
        %v2477 = vand.u32 %v1408, 4294901760
        %2478 = vmatpush.msra.mxu0 %v2477
        %v2479 = vand.u32 %v1406, 4294901760
        %2480 = vmatpush.msra.mxu0 %v2479
        %v2481 = vand.u32 %v1404, 4294901760
        %2482 = vmatpush.msra.mxu0 %v2481
        %v2483 = vand.u32 %v1402, 4294901760
        %2484 = vmatpush.msra.mxu0 %v2483
        %v2485 = vand.u32 %v1935, 4294901760
        %2486 = vmatmul.f32.gmra.mxu0 %v2485
        %v2487 = vpop.f32.mrf.mxu0
        %v2488 = vadd.f32 %v2451, %v2487
        %v2489 = vand.u32 %v1938, 4294901760
        %2490 = vmatmul.f32.gmra.mxu0 %v2489
        %v2491 = vpop.f32.mrf.mxu0
        %v2492 = vadd.f32 %v2455, %v2491
        %v2493 = vand.u32 %v1941, 4294901760
        %2494 = vmatmul.f32.gmra.mxu0 %v2493
        %v2495 = vpop.f32.mrf.mxu0
        %v2496 = vadd.f32 %v2459, %v2495
        %v2497 = vand.u32 %v1944, 4294901760
        %2498 = vmatmul.f32.gmra.mxu0 %v2497
        %v2499 = vpop.f32.mrf.mxu0
        %v2500 = vadd.f32 %v2463, %v2499
        %2501 = vdwg.mxu0
        %v2502 = vld [vmem:[%s8] sm:$0xff]
        %v2503 = vld [vmem:[%s8 + $0x8] sm:$0xff]
        %v2504 = vld [vmem:[%s8 + $0x10] sm:$0xff]
        %v2505 = vld [vmem:[%s8 + $0x18] sm:$0xff]
        %2507 = vset.pattern.permute.xlu0 0
        %2508 = vperm.xlu0 %2507, %v2502
        %v2509 = vpop.permute.xlu0 %2508
        %2512 = vset.pattern.permute.xlu0 0
        %2513 = vperm.xlu0 %2512, %v2503
        %v2514 = vpop.permute.xlu0 %2513
        %2517 = vset.pattern.permute.xlu0 0
        %2518 = vperm.xlu0 %2517, %v2504
        %v2519 = vpop.permute.xlu0 %2518
        %2522 = vset.pattern.permute.xlu0 0
        %2523 = vperm.xlu0 %2522, %v2505
        %v2524 = vpop.permute.xlu0 %2523
        %v2526 = vadd.f32 %v2210, %v2509
        %v2527 = vadd.f32 %v2488, %v2509
        %v2528 = vadd.f32 %v2214, %v2514
        %v2529 = vadd.f32 %v2492, %v2514
        %v2530 = vadd.f32 %v2218, %v2519
        %v2531 = vadd.f32 %v2496, %v2519
        %v2532 = vadd.f32 %v2222, %v2524
        %v2533 = vadd.f32 %v2500, %v2524
        %vm2534 = vcmp.ge.f32.partialorder %v2526, 0.0
        %vm2535 = vcmp.ge.f32.partialorder %v2527, 0.0
        %vm2536 = vcmp.ge.f32.partialorder %v2528, 0.0
        %vm2537 = vcmp.ge.f32.partialorder %v2529, 0.0
        %vm2538 = vcmp.ge.f32.partialorder %v2530, 0.0
        %vm2539 = vcmp.ge.f32.partialorder %v2531, 0.0
        %vm2540 = vcmp.ge.f32.partialorder %v2532, 0.0
        %vm2541 = vcmp.ge.f32.partialorder %v2533, 0.0
        %s2542 = sld [smem:[#allocation2 + $0x2]]
        %v2543 = vstv %s2542
        %v2544 = vmul.f32 %v2543, %v2526
        %v2545 = vmul.f32 %v2543, %v2527
        %v2546 = vmul.f32 %v2543, %v2528
        %v2547 = vmul.f32 %v2543, %v2529
        %v2548 = vmul.f32 %v2543, %v2530
        %v2549 = vmul.f32 %v2543, %v2531
        %v2550 = vmul.f32 %v2543, %v2532
        %v2551 = vmul.f32 %v2543, %v2533
        %v2552 = vsel %vm2534, %v2526, %v2544
        %v2553 = vsel %vm2535, %v2527, %v2545
        %v2554 = vsel %vm2536, %v2528, %v2546
        %v2555 = vsel %vm2537, %v2529, %v2547
        %v2556 = vsel %vm2538, %v2530, %v2548
        %v2557 = vsel %vm2539, %v2531, %v2549
        %v2558 = vsel %vm2540, %v2532, %v2550
        %v2559 = vsel %vm2541, %v2533, %v2551
        %v2560 = vld [vmem:[%s9] sm:$0xff]
        %v2561 = vld [vmem:[%s10] sm:$0xff]
        %2563 = vset.pattern.permute.xlu0 0
        %2564 = vperm.xlu0 %2563, %v2561
        %v2565 = vpop.permute.xlu0 %2564
        %v2568 = vsel %vm1933, %v2560, 0
        %2570 = vmatpush.msra.mxu0 0.0
        %2571 = vmatpush.msra.mxu0 0.0
        %2572 = vmatpush.msra.mxu0 0.0
        %2573 = vmatpush.msra.mxu0 0.0
        %2574 = vmatpush.msra.mxu0 0.0
        %2575 = vmatpush.msra.mxu0 0.0
        %2576 = vmatpush.msra.mxu0 0.0
        %2577 = vmatpush.msra.mxu0 0.0
        %2578 = vmatpush.msra.mxu0 0.0
        %2579 = vmatpush.msra.mxu0 0.0
        %2580 = vmatpush.msra.mxu0 0.0
        %2581 = vmatpush.msra.mxu0 0.0
        %v2582 = vand.u32 %v2558, 4294901760
        %2583 = vmatpush.msra.mxu0 %v2582
        %v2584 = vand.u32 %v2556, 4294901760
        %2585 = vmatpush.msra.mxu0 %v2584
        %v2586 = vand.u32 %v2554, 4294901760
        %2587 = vmatpush.msra.mxu0 %v2586
        %v2588 = vand.u32 %v2552, 4294901760
        %2589 = vmatpush.msra.mxu0 %v2588
        %v2590 = vand.u32 %v2568, 4294901760
        %v2591 = vsub.f32 %v2568, %v2590
        %v2592 = vand.u32 %v2591, 4294901760
        %v2593 = vsub.f32 %v2591, %v2592
        %v2594 = vand.u32 %v2593, 4294901760
        %2595 = vmatmul.f32.gmra.mxu0 %v2594
        %v2596 = vpop.f32.mrf.mxu0
        %v2597 = vadd.f32 %v2565, %v2596
        %2598 = vdwg.mxu0
        %2599 = vmatpush.msra.mxu0 0.0
        %2600 = vmatpush.msra.mxu0 0.0
        %2601 = vmatpush.msra.mxu0 0.0
        %2602 = vmatpush.msra.mxu0 0.0
        %2603 = vmatpush.msra.mxu0 0.0
        %2604 = vmatpush.msra.mxu0 0.0
        %2605 = vmatpush.msra.mxu0 0.0
        %2606 = vmatpush.msra.mxu0 0.0
        %2607 = vmatpush.msra.mxu0 0.0
        %2608 = vmatpush.msra.mxu0 0.0
        %2609 = vmatpush.msra.mxu0 0.0
        %2610 = vmatpush.msra.mxu0 0.0
        %v2611 = vand.u32 %v2558, 4294901760
        %v2612 = vsub.f32 %v2558, %v2611
        %v2613 = vand.u32 %v2612, 4294901760
        %v2614 = vsub.f32 %v2612, %v2613
        %v2615 = vand.u32 %v2614, 4294901760
        %2616 = vmatpush.msra.mxu0 %v2615
        %v2617 = vand.u32 %v2556, 4294901760
        %v2618 = vsub.f32 %v2556, %v2617
        %v2619 = vand.u32 %v2618, 4294901760
        %v2620 = vsub.f32 %v2618, %v2619
        %v2621 = vand.u32 %v2620, 4294901760
        %2622 = vmatpush.msra.mxu0 %v2621
        %v2623 = vand.u32 %v2554, 4294901760
        %v2624 = vsub.f32 %v2554, %v2623
        %v2625 = vand.u32 %v2624, 4294901760
        %v2626 = vsub.f32 %v2624, %v2625
        %v2627 = vand.u32 %v2626, 4294901760
        %2628 = vmatpush.msra.mxu0 %v2627
        %v2629 = vand.u32 %v2552, 4294901760
        %v2630 = vsub.f32 %v2552, %v2629
        %v2631 = vand.u32 %v2630, 4294901760
        %v2632 = vsub.f32 %v2630, %v2631
        %v2633 = vand.u32 %v2632, 4294901760
        %2634 = vmatpush.msra.mxu0 %v2633
        %v2635 = vand.u32 %v2568, 4294901760
        %2636 = vmatmul.f32.gmra.mxu0 %v2635
        %v2637 = vpop.f32.mrf.mxu0
        %v2638 = vadd.f32 %v2597, %v2637
        %2639 = vdwg.mxu0
        %2640 = vmatpush.msra.mxu0 0.0
        %2641 = vmatpush.msra.mxu0 0.0
        %2642 = vmatpush.msra.mxu0 0.0
        %2643 = vmatpush.msra.mxu0 0.0
        %2644 = vmatpush.msra.mxu0 0.0
        %2645 = vmatpush.msra.mxu0 0.0
        %2646 = vmatpush.msra.mxu0 0.0
        %2647 = vmatpush.msra.mxu0 0.0
        %2648 = vmatpush.msra.mxu0 0.0
        %2649 = vmatpush.msra.mxu0 0.0
        %2650 = vmatpush.msra.mxu0 0.0
        %2651 = vmatpush.msra.mxu0 0.0
        %v2652 = vand.u32 %v2558, 4294901760
        %v2653 = vsub.f32 %v2558, %v2652
        %2654 = vmatpush.msra.mxu0 %v2653
        %v2655 = vand.u32 %v2556, 4294901760
        %v2656 = vsub.f32 %v2556, %v2655
        %2657 = vmatpush.msra.mxu0 %v2656
        %v2658 = vand.u32 %v2554, 4294901760
        %v2659 = vsub.f32 %v2554, %v2658
        %2660 = vmatpush.msra.mxu0 %v2659
        %v2661 = vand.u32 %v2552, 4294901760
        %v2662 = vsub.f32 %v2552, %v2661
        %2663 = vmatpush.msra.mxu0 %v2662
        %v2664 = vand.u32 %v2568, 4294901760
        %v2665 = vsub.f32 %v2568, %v2664
        %2666 = vmatmul.f32.gmra.mxu0 %v2665
        %v2667 = vpop.f32.mrf.mxu0
        %v2668 = vadd.f32 %v2638, %v2667
        %2669 = vdwg.mxu0
        %2670 = vmatpush.msra.mxu0 0.0
        %2671 = vmatpush.msra.mxu0 0.0
        %2672 = vmatpush.msra.mxu0 0.0
        %2673 = vmatpush.msra.mxu0 0.0
        %2674 = vmatpush.msra.mxu0 0.0
        %2675 = vmatpush.msra.mxu0 0.0
        %2676 = vmatpush.msra.mxu0 0.0
        %2677 = vmatpush.msra.mxu0 0.0
        %2678 = vmatpush.msra.mxu0 0.0
        %2679 = vmatpush.msra.mxu0 0.0
        %2680 = vmatpush.msra.mxu0 0.0
        %2681 = vmatpush.msra.mxu0 0.0
        %v2682 = vand.u32 %v2558, 4294901760
        %2683 = vmatpush.msra.mxu0 %v2682
        %v2684 = vand.u32 %v2556, 4294901760
        %2685 = vmatpush.msra.mxu0 %v2684
        %v2686 = vand.u32 %v2554, 4294901760
        %2687 = vmatpush.msra.mxu0 %v2686
        %v2688 = vand.u32 %v2552, 4294901760
        %2689 = vmatpush.msra.mxu0 %v2688
        %v2690 = vand.u32 %v2568, 4294901760
        %v2691 = vsub.f32 %v2568, %v2690
        %v2692 = vand.u32 %v2691, 4294901760
        %2693 = vmatmul.f32.gmra.mxu0 %v2692
        %v2694 = vpop.f32.mrf.mxu0
        %v2695 = vadd.f32 %v2668, %v2694
        %2696 = vdwg.mxu0
        %2697 = vmatpush.msra.mxu0 0.0
        %2698 = vmatpush.msra.mxu0 0.0
        %2699 = vmatpush.msra.mxu0 0.0
        %2700 = vmatpush.msra.mxu0 0.0
        %2701 = vmatpush.msra.mxu0 0.0
        %2702 = vmatpush.msra.mxu0 0.0
        %2703 = vmatpush.msra.mxu0 0.0
        %2704 = vmatpush.msra.mxu0 0.0
        %2705 = vmatpush.msra.mxu0 0.0
        %2706 = vmatpush.msra.mxu0 0.0
        %2707 = vmatpush.msra.mxu0 0.0
        %2708 = vmatpush.msra.mxu0 0.0
        %v2709 = vand.u32 %v2558, 4294901760
        %v2710 = vsub.f32 %v2558, %v2709
        %v2711 = vand.u32 %v2710, 4294901760
        %2712 = vmatpush.msra.mxu0 %v2711
        %v2713 = vand.u32 %v2556, 4294901760
        %v2714 = vsub.f32 %v2556, %v2713
        %v2715 = vand.u32 %v2714, 4294901760
        %2716 = vmatpush.msra.mxu0 %v2715
        %v2717 = vand.u32 %v2554, 4294901760
        %v2718 = vsub.f32 %v2554, %v2717
        %v2719 = vand.u32 %v2718, 4294901760
        %2720 = vmatpush.msra.mxu0 %v2719
        %v2721 = vand.u32 %v2552, 4294901760
        %v2722 = vsub.f32 %v2552, %v2721
        %v2723 = vand.u32 %v2722, 4294901760
        %2724 = vmatpush.msra.mxu0 %v2723
        %v2725 = vand.u32 %v2568, 4294901760
        %2726 = vmatmul.f32.gmra.mxu0 %v2725
        %v2727 = vpop.f32.mrf.mxu0
        %v2728 = vadd.f32 %v2695, %v2727
        %2729 = vdwg.mxu0
        %2730 = vmatpush.msra.mxu0 0.0
        %2731 = vmatpush.msra.mxu0 0.0
        %2732 = vmatpush.msra.mxu0 0.0
        %2733 = vmatpush.msra.mxu0 0.0
        %2734 = vmatpush.msra.mxu0 0.0
        %2735 = vmatpush.msra.mxu0 0.0
        %2736 = vmatpush.msra.mxu0 0.0
        %2737 = vmatpush.msra.mxu0 0.0
        %2738 = vmatpush.msra.mxu0 0.0
        %2739 = vmatpush.msra.mxu0 0.0
        %2740 = vmatpush.msra.mxu0 0.0
        %2741 = vmatpush.msra.mxu0 0.0
        %v2742 = vand.u32 %v2558, 4294901760
        %2743 = vmatpush.msra.mxu0 %v2742
        %v2744 = vand.u32 %v2556, 4294901760
        %2745 = vmatpush.msra.mxu0 %v2744
        %v2746 = vand.u32 %v2554, 4294901760
        %2747 = vmatpush.msra.mxu0 %v2746
        %v2748 = vand.u32 %v2552, 4294901760
        %2749 = vmatpush.msra.mxu0 %v2748
        %v2750 = vand.u32 %v2568, 4294901760
        %2751 = vmatmul.f32.gmra.mxu0 %v2750
        %v2752 = vpop.f32.mrf.mxu0
        %v2753 = vadd.f32 %v2728, %v2752
        %2754 = vdwg.mxu0
        %2755 = vmatpush.msra.mxu0 0.0
        %2756 = vmatpush.msra.mxu0 0.0
        %2757 = vmatpush.msra.mxu0 0.0
        %2758 = vmatpush.msra.mxu0 0.0
        %2759 = vmatpush.msra.mxu0 0.0
        %2760 = vmatpush.msra.mxu0 0.0
        %2761 = vmatpush.msra.mxu0 0.0
        %2762 = vmatpush.msra.mxu0 0.0
        %2763 = vmatpush.msra.mxu0 0.0
        %2764 = vmatpush.msra.mxu0 0.0
        %2765 = vmatpush.msra.mxu0 0.0
        %2766 = vmatpush.msra.mxu0 0.0
        %v2767 = vand.u32 %v2559, 4294901760
        %2768 = vmatpush.msra.mxu0 %v2767
        %v2769 = vand.u32 %v2557, 4294901760
        %2770 = vmatpush.msra.mxu0 %v2769
        %v2771 = vand.u32 %v2555, 4294901760
        %2772 = vmatpush.msra.mxu0 %v2771
        %v2773 = vand.u32 %v2553, 4294901760
        %2774 = vmatpush.msra.mxu0 %v2773
        %v2775 = vand.u32 %v2568, 4294901760
        %v2776 = vsub.f32 %v2568, %v2775
        %v2777 = vand.u32 %v2776, 4294901760
        %v2778 = vsub.f32 %v2776, %v2777
        %v2779 = vand.u32 %v2778, 4294901760
        %2780 = vmatmul.f32.gmra.mxu0 %v2779
        %v2781 = vpop.f32.mrf.mxu0
        %v2782 = vadd.f32 %v2565, %v2781
        %2783 = vdwg.mxu0
        %2784 = vmatpush.msra.mxu0 0.0
        %2785 = vmatpush.msra.mxu0 0.0
        %2786 = vmatpush.msra.mxu0 0.0
        %2787 = vmatpush.msra.mxu0 0.0
        %2788 = vmatpush.msra.mxu0 0.0
        %2789 = vmatpush.msra.mxu0 0.0
        %2790 = vmatpush.msra.mxu0 0.0
        %2791 = vmatpush.msra.mxu0 0.0
        %2792 = vmatpush.msra.mxu0 0.0
        %2793 = vmatpush.msra.mxu0 0.0
        %2794 = vmatpush.msra.mxu0 0.0
        %2795 = vmatpush.msra.mxu0 0.0
        %v2796 = vand.u32 %v2559, 4294901760
        %v2797 = vsub.f32 %v2559, %v2796
        %v2798 = vand.u32 %v2797, 4294901760
        %v2799 = vsub.f32 %v2797, %v2798
        %v2800 = vand.u32 %v2799, 4294901760
        %2801 = vmatpush.msra.mxu0 %v2800
        %v2802 = vand.u32 %v2557, 4294901760
        %v2803 = vsub.f32 %v2557, %v2802
        %v2804 = vand.u32 %v2803, 4294901760
        %v2805 = vsub.f32 %v2803, %v2804
        %v2806 = vand.u32 %v2805, 4294901760
        %2807 = vmatpush.msra.mxu0 %v2806
        %v2808 = vand.u32 %v2555, 4294901760
        %v2809 = vsub.f32 %v2555, %v2808
        %v2810 = vand.u32 %v2809, 4294901760
        %v2811 = vsub.f32 %v2809, %v2810
        %v2812 = vand.u32 %v2811, 4294901760
        %2813 = vmatpush.msra.mxu0 %v2812
        %v2814 = vand.u32 %v2553, 4294901760
        %v2815 = vsub.f32 %v2553, %v2814
        %v2816 = vand.u32 %v2815, 4294901760
        %v2817 = vsub.f32 %v2815, %v2816
        %v2818 = vand.u32 %v2817, 4294901760
        %2819 = vmatpush.msra.mxu0 %v2818
        %v2820 = vand.u32 %v2568, 4294901760
        %2821 = vmatmul.f32.gmra.mxu0 %v2820
        %v2822 = vpop.f32.mrf.mxu0
        %v2823 = vadd.f32 %v2782, %v2822
        %2824 = vdwg.mxu0
        %2825 = vmatpush.msra.mxu0 0.0
        %2826 = vmatpush.msra.mxu0 0.0
        %2827 = vmatpush.msra.mxu0 0.0
        %2828 = vmatpush.msra.mxu0 0.0
        %2829 = vmatpush.msra.mxu0 0.0
        %2830 = vmatpush.msra.mxu0 0.0
        %2831 = vmatpush.msra.mxu0 0.0
        %2832 = vmatpush.msra.mxu0 0.0
        %2833 = vmatpush.msra.mxu0 0.0
        %2834 = vmatpush.msra.mxu0 0.0
        %2835 = vmatpush.msra.mxu0 0.0
        %2836 = vmatpush.msra.mxu0 0.0
        %v2837 = vand.u32 %v2559, 4294901760
        %v2838 = vsub.f32 %v2559, %v2837
        %2839 = vmatpush.msra.mxu0 %v2838
        %v2840 = vand.u32 %v2557, 4294901760
        %v2841 = vsub.f32 %v2557, %v2840
        %2842 = vmatpush.msra.mxu0 %v2841
        %v2843 = vand.u32 %v2555, 4294901760
        %v2844 = vsub.f32 %v2555, %v2843
        %2845 = vmatpush.msra.mxu0 %v2844
        %v2846 = vand.u32 %v2553, 4294901760
        %v2847 = vsub.f32 %v2553, %v2846
        %2848 = vmatpush.msra.mxu0 %v2847
        %v2849 = vand.u32 %v2568, 4294901760
        %v2850 = vsub.f32 %v2568, %v2849
        %2851 = vmatmul.f32.gmra.mxu0 %v2850
        %v2852 = vpop.f32.mrf.mxu0
        %v2853 = vadd.f32 %v2823, %v2852
        %2854 = vdwg.mxu0
        %2855 = vmatpush.msra.mxu0 0.0
        %2856 = vmatpush.msra.mxu0 0.0
        %2857 = vmatpush.msra.mxu0 0.0
        %2858 = vmatpush.msra.mxu0 0.0
        %2859 = vmatpush.msra.mxu0 0.0
        %2860 = vmatpush.msra.mxu0 0.0
        %2861 = vmatpush.msra.mxu0 0.0
        %2862 = vmatpush.msra.mxu0 0.0
        %2863 = vmatpush.msra.mxu0 0.0
        %2864 = vmatpush.msra.mxu0 0.0
        %2865 = vmatpush.msra.mxu0 0.0
        %2866 = vmatpush.msra.mxu0 0.0
        %v2867 = vand.u32 %v2559, 4294901760
        %2868 = vmatpush.msra.mxu0 %v2867
        %v2869 = vand.u32 %v2557, 4294901760
        %2870 = vmatpush.msra.mxu0 %v2869
        %v2871 = vand.u32 %v2555, 4294901760
        %2872 = vmatpush.msra.mxu0 %v2871
        %v2873 = vand.u32 %v2553, 4294901760
        %2874 = vmatpush.msra.mxu0 %v2873
        %v2875 = vand.u32 %v2568, 4294901760
        %v2876 = vsub.f32 %v2568, %v2875
        %v2877 = vand.u32 %v2876, 4294901760
        %2878 = vmatmul.f32.gmra.mxu0 %v2877
        %v2879 = vpop.f32.mrf.mxu0
        %v2880 = vadd.f32 %v2853, %v2879
        %2881 = vdwg.mxu0
        %2882 = vmatpush.msra.mxu0 0.0
        %2883 = vmatpush.msra.mxu0 0.0
        %2884 = vmatpush.msra.mxu0 0.0
        %2885 = vmatpush.msra.mxu0 0.0
        %2886 = vmatpush.msra.mxu0 0.0
        %2887 = vmatpush.msra.mxu0 0.0
        %2888 = vmatpush.msra.mxu0 0.0
        %2889 = vmatpush.msra.mxu0 0.0
        %2890 = vmatpush.msra.mxu0 0.0
        %2891 = vmatpush.msra.mxu0 0.0
        %2892 = vmatpush.msra.mxu0 0.0
        %2893 = vmatpush.msra.mxu0 0.0
        %v2894 = vand.u32 %v2559, 4294901760
        %v2895 = vsub.f32 %v2559, %v2894
        %v2896 = vand.u32 %v2895, 4294901760
        %2897 = vmatpush.msra.mxu0 %v2896
        %v2898 = vand.u32 %v2557, 4294901760
        %v2899 = vsub.f32 %v2557, %v2898
        %v2900 = vand.u32 %v2899, 4294901760
        %2901 = vmatpush.msra.mxu0 %v2900
        %v2902 = vand.u32 %v2555, 4294901760
        %v2903 = vsub.f32 %v2555, %v2902
        %v2904 = vand.u32 %v2903, 4294901760
        %2905 = vmatpush.msra.mxu0 %v2904
        %v2906 = vand.u32 %v2553, 4294901760
        %v2907 = vsub.f32 %v2553, %v2906
        %v2908 = vand.u32 %v2907, 4294901760
        %2909 = vmatpush.msra.mxu0 %v2908
        %v2910 = vand.u32 %v2568, 4294901760
        %2911 = vmatmul.f32.gmra.mxu0 %v2910
        %v2912 = vpop.f32.mrf.mxu0
        %v2913 = vadd.f32 %v2880, %v2912
        %2914 = vdwg.mxu0
        %2915 = vmatpush.msra.mxu0 0.0
        %2916 = vmatpush.msra.mxu0 0.0
        %2917 = vmatpush.msra.mxu0 0.0
        %2918 = vmatpush.msra.mxu0 0.0
        %2919 = vmatpush.msra.mxu0 0.0
        %2920 = vmatpush.msra.mxu0 0.0
        %2921 = vmatpush.msra.mxu0 0.0
        %2922 = vmatpush.msra.mxu0 0.0
        %2923 = vmatpush.msra.mxu0 0.0
        %2924 = vmatpush.msra.mxu0 0.0
        %2925 = vmatpush.msra.mxu0 0.0
        %2926 = vmatpush.msra.mxu0 0.0
        %v2927 = vand.u32 %v2559, 4294901760
        %2928 = vmatpush.msra.mxu0 %v2927
        %v2929 = vand.u32 %v2557, 4294901760
        %2930 = vmatpush.msra.mxu0 %v2929
        %v2931 = vand.u32 %v2555, 4294901760
        %2932 = vmatpush.msra.mxu0 %v2931
        %v2933 = vand.u32 %v2553, 4294901760
        %2934 = vmatpush.msra.mxu0 %v2933
        %v2935 = vand.u32 %v2568, 4294901760
        %2936 = vmatmul.f32.gmra.mxu0 %v2935
        %v2937 = vpop.f32.mrf.mxu0
        %v2938 = vadd.f32 %v2913, %v2937
        %2939 = vdwg.mxu0
        %2940 = vst [vmem:[%s438] sm:$0xff] %v2753
        %2941 = vst [vmem:[%s438 + $0x8] sm:$0xff] %v2938
        %s2942 = smul.u32 2, %s28
        %p2943 = scmp.lt.s32.totalorder %s27, 1
        %s2944 = scalar_select %p2943, %s27, 1
        %p2945 = scmp.lt.s32.totalorder %s2942, 1
        %s2946 = scalar_select %p2945, %s2942, 1
        %s2947 = smul.addr %s2944, 2
        %s2948 = sadd.s32 %s2946, %s2947
        %s2949 = smul.addr %s2948, 8
        %s2950 = scalar_lea.vmem %s11, %s2949
        // Predicated region
        $region69: #{reflective_to_emissive.1} parent=63 // pred_check
          %p2951 = pneg %p293
        $region70: #{reflective_to_emissive.1} parent=63 // pred_check_branch
          %2953 = sbr.rel (%p2951) target = $region72
        $region71: #{reflective_to_emissive.1} parent=63 // pred_region
          %s2954 = smul.u32 2, %s28
        $region72: #{reflective_to_emissive.1} parent=63 // pred_fallthru
          _
      $region64: #{reflective_to_emissive.1} parent=5 // pred_fallthru
        _
      %p2955 = scmp.le.s32.totalorder 2, %s18
      // Predicated region
      $region73: #{reflective_to_emissive.1} parent=5 // pred_check
        %p2956 = pneg %p2955
      $region74: #{reflective_to_emissive.1} parent=5 // pred_check_branch
        %2958 = sbr.rel (%p2956) target = $region76
      $region75: #{reflective_to_emissive.1} parent=5 // pred_region
        %s2959 = ssub.s32 %s18, 2
        // Predicated region
        $region77: #{reflective_to_emissive.1} parent=75 // pred_check
          %p2960 = pneg %p299
        $region78: #{reflective_to_emissive.1} parent=75 // pred_check_branch
          %2962 = sbr.rel (%p2960) target = $region80
        $region79: #{reflective_to_emissive.1} parent=75 // pred_region
          %s2963 = smul.u32 2, %s30
          %p2964 = scmp.lt.s32.totalorder %s29, 1
          %s2965 = scalar_select %p2964, %s29, 1
          %p2966 = scmp.lt.s32.totalorder %s2963, 1
          %s2967 = scalar_select %p2966, %s2963, 1
          %s2968 = smul.addr %s2965, 2
          %s2969 = sadd.s32 %s2967, %s2968
          %s2970 = smul.addr %s2969, 8
          %s2971 = scalar_lea.vmem %s11, %s2970
        $region80: #{reflective_to_emissive.1} parent=75 // pred_fallthru
          _
      $region76: #{reflective_to_emissive.1} parent=5 // pred_fallthru
        _
    $region6: #{reflective_to_emissive.1} parent=1 // loop_footer
      %s22 = sadd.s32 1, %s18
    $region7: #{reflective_to_emissive.1} parent=1 // loop_footer_branch
      %17 = sbr.rel target = $region3
    $region8: #{reflective_to_emissive.1} parent=1 // loop_exit
      _
    %2972 = vsyncpa [#allocation3], 1
    %s2973 = scalar_lea.sflag [#allocation3], 1
    %2974 = vsyncpa %s2973, 1

</llo_original>
